<compile_context>
chip_gen: v7x
topology: tpu7x:2x2x1
jax: 0.10.0
libtpu: 0.0.40
codegen_flags: <defaults>
</compile_context>

<pallas_src>
import functools

import jax
import jax.numpy as jnp
from jax import lax
from jax.experimental import pallas as pl
from jax.experimental.pallas import tpu as pltpu


# ---------------------------------------------------------------------------
# Fused Pallas kernel: conv1x1+BN+ReLU -> conv3x3+BN+ReLU -> conv1x1+BN(+id)+ReLU
# ---------------------------------------------------------------------------

def _bottleneck_kernel(x_ref, w1_ref, b1_ref, w2_ref, b2_ref, w3_ref, b3_ref,
                       o_ref, xpad_ref, *, stride, skip_residual, compute_dtype):
    # x_ref:    (Bt, H, W, Cin_p)
    # w1_ref:   (Cin_p, width_p)          b1_ref: (1, width_p)
    # w2_ref:   (3, 3, width_p, width_p)  b2_ref: (1, width_p)
    # w3_ref:   (width_p, out_ch_p)       b3_ref: (1, out_ch_p)
    # o_ref:    (Bt, Hout, Wout, out_ch_p)
    # xpad_ref: (Bt, H+2, W+2, width_p) VMEM scratch (compute_dtype) for 3x3 halo
    Bt, H, W, Cin = x_ref.shape
    width_p = w1_ref.shape[1]
    out_ch = w3_ref.shape[1]
    Hout = (H + 2 - 3) // stride + 1
    Wout = (W + 2 - 3) // stride + 1

    x = x_ref[...]                                       # (Bt, H, W, Cin_p)

    # ---- stage 1: 1x1 conv (BN1 scale folded into w1) + bias + ReLU ----------
    y1 = jnp.dot(x.reshape(Bt * H * W, Cin).astype(compute_dtype), w1_ref[...],
                 preferred_element_type=jnp.float32)
    y1 = jnp.maximum(y1 + b1_ref[...], 0.0)              # (Bt*H*W, width_p) f32

    # ---- stage 2: 3x3 conv (pad=1, stride) (BN2 folded) + bias + ReLU --------
    # Zero only the 1-pixel halo every step (interior fully overwritten below);
    # rewriting it per-step keeps the kernel correct when the "parallel" batch
    # grid is split across TensorCores (per-core scratch).  Scratch is stored in
    # compute_dtype: stage-2 matmul inputs are cast to that dtype anyway.
    zrow = jnp.zeros((Bt, 1, W + 2, width_p), xpad_ref.dtype)
    zcol = jnp.zeros((Bt, H + 2, 1, width_p), xpad_ref.dtype)
    xpad_ref[:, 0:1, :, :] = zrow
    xpad_ref[:, H + 1:H + 2, :, :] = zrow
    xpad_ref[:, :, 0:1, :] = zcol
    xpad_ref[:, :, W + 1:W + 2, :] = zcol
    xpad_ref[:, 1:H + 1, 1:W + 1, :] = (
        y1.reshape(Bt, H, W, width_p).astype(xpad_ref.dtype))

    M2 = Bt * Hout * Wout
    acc = None
    if stride == 1:
        # Fast path: slice each tap's window straight from the VMEM ref so only
        # one (Bt, Hout, Wout, width_p) patch is live at a time (no bulk load,
        # no bulk cast, no vreg spills).
        for kh in range(3):
            for kw in range(3):
                patch = xpad_ref[:, kh:kh + Hout, kw:kw + Wout, :]
                t = jnp.dot(patch.reshape(M2, width_p), w2_ref[kh, kw],
                            preferred_element_type=jnp.float32)
                acc = t if acc is None else acc + t
    else:
        # TODO(synk): stride>1 uses strided value slices (XLU relayout per tap);
        # only the stride=1 identity-residual path is perf-critical here.
        xp = xpad_ref[...]
        for kh in range(3):
            for kw in range(3):
                patch = xp[:, kh:kh + (Hout - 1) * stride + 1:stride,
                              kw:kw + (Wout - 1) * stride + 1:stride, :]
                t = jnp.dot(patch.reshape(M2, width_p), w2_ref[kh, kw],
                            preferred_element_type=jnp.float32)
                acc = t if acc is None else acc + t
    y2 = jnp.maximum(acc + b2_ref[...], 0.0)             # (M2, width_p) f32

    # ---- stage 3: 1x1 conv (BN3 folded) + bias (+ identity) + ReLU -----------
    y3 = jnp.dot(y2.astype(compute_dtype), w3_ref[...],
                 preferred_element_type=jnp.float32)
    y3 = y3 + b3_ref[...]
    if not skip_residual:
        # downsample=None -> identity residual (stride==1, Cin_p == out_ch_p)
        y3 = y3 + x.reshape(Bt * H * W, out_ch).astype(jnp.float32)
    y3 = jnp.maximum(y3, 0.0)
    o_ref[...] = y3.reshape(Bt, Hout, Wout, out_ch).astype(o_ref.dtype)


# ---------------------------------------------------------------------------
# Host-side parameter prep (BN fold + lane padding) and the pallas_call wrapper
# ---------------------------------------------------------------------------

def _fold_bn(gamma, beta, mean, var, eps=1e-5):
    scale = gamma / jnp.sqrt(var + eps)
    bias = beta - mean * scale
    return scale, bias


def _round_up(n, m):
    return -(-n // m) * m


def _prepare_params(params, compute_dtype, lane=128):
    """Fold BN scale into conv weights; zero-pad Cin / width / out_ch up to
    lane-dense multiples of 128 (padded channels stay exactly zero, so numerics
    are unchanged; real ResNet stages >=256 channels are already multiples)."""
    s1, b1 = _fold_bn(*params["bn1"])
    s2, b2 = _fold_bn(*params["bn2"])
    s3, b3 = _fold_bn(*params["bn3"])

    w1 = params["w1"] * s1[None, :]                  # (Cin, width)
    w2 = params["w2"] * s2[None, None, None, :]      # (3, 3, width, width)
    w3 = params["w3"] * s3[None, :]                  # (width, out_ch)

    Cin, width = w1.shape
    out_ch = w3.shape[1]
    Cin_p = _round_up(Cin, lane)
    width_p = _round_up(width, lane)
    out_ch_p = _round_up(out_ch, lane)

    w1 = jnp.pad(w1, ((0, Cin_p - Cin), (0, width_p - width)))
    b1 = jnp.pad(b1, (0, width_p - width))
    w2 = jnp.pad(w2, ((0, 0), (0, 0), (0, width_p - width), (0, width_p - width)))
    b2 = jnp.pad(b2, (0, width_p - width))
    w3 = jnp.pad(w3, ((0, width_p - width), (0, out_ch_p - out_ch)))
    b3 = jnp.pad(b3, (0, out_ch_p - out_ch))

    cd = compute_dtype
    return (w1.astype(cd), b1.reshape(1, -1).astype(jnp.float32),
            w2.astype(cd), b2.reshape(1, -1).astype(jnp.float32),
            w3.astype(cd), b3.reshape(1, -1).astype(jnp.float32))


def _pick_batch_tile(B, H, W, target_rows=512):
    """Pack batch images per grid step so M = Bt*H*W approaches target_rows,
    while keeping >= 2 grid steps so v7x's two TensorCores both get work."""
    cap = max(1, B // 2)
    bt = max(1, min(cap, -(-target_rows // (H * W))))
    while B % bt:
        bt -= 1
    return bt


def _vmem_limit_bytes(Bt, H, W, Hout, Wout, Cin_p, width_p, out_ch_p,
                      io_dtype, compute_dtype):
    """Explicit scoped-VMEM sizing from the known buffers (+ headroom)."""
    isz = lambda dt: jnp.dtype(dt).itemsize
    x_blk = Bt * H * W * Cin_p * isz(io_dtype) * 2               # double-buffered
    o_blk = Bt * Hout * Wout * out_ch_p * isz(io_dtype) * 2      # double-buffered
    w_blk = (Cin_p * width_p + 9 * width_p * width_p
             + width_p * out_ch_p) * isz(compute_dtype)          # single-buffered
    b_blk = (2 * width_p + out_ch_p) * 4
    scratch = Bt * (H + 2) * (W + 2) * width_p * isz(compute_dtype)
    total = x_blk + o_blk + w_blk + b_blk + scratch
    # ~2x headroom for compiler temporaries (per-tap patches, f32 accumulators).
    return int(min(100 << 20, max(16 << 20, 2 * total + (4 << 20))))


def bottleneck_forward_nhwc(x, params, stride=1, skip_residual=False,
                            compute_dtype=jnp.bfloat16, batch_tile=None):
    B, H, W, Cin = x.shape
    out_ch = params["w3"].shape[1]
    w1, b1, w2, b2, w3, b3 = _prepare_params(params, compute_dtype)
    Cin_p, width_p = w1.shape
    out_ch_p = w3.shape[1]
    Hout = (H + 2 - 3) // stride + 1
    Wout = (W + 2 - 3) // stride + 1
    if not skip_residual:
        assert stride == 1 and Cin == out_ch, (
            "identity residual requires stride=1 and inplanes == planes*4")

    if Cin_p != Cin:
        x = jnp.pad(x, ((0, 0), (0, 0), (0, 0), (0, Cin_p - Cin)))

    Bt = batch_tile if batch_tile is not None else _pick_batch_tile(B, H, W)
    assert B % Bt == 0, "batch tile must divide batch"

    kernel = functools.partial(_bottleneck_kernel, stride=stride,
                               skip_residual=skip_residual,
                               compute_dtype=compute_dtype)
    const = dict(pipeline_mode=pl.Buffered(1))   # weights/biases: DMA'd once
    out = pl.pallas_call(
        kernel,
        out_shape=jax.ShapeDtypeStruct((B, Hout, Wout, out_ch_p), x.dtype),
        grid=(B // Bt,),
        in_specs=[
            pl.BlockSpec((Bt, H, W, Cin_p), lambda b: (b, 0, 0, 0)),
            pl.BlockSpec((Cin_p, width_p), lambda b: (0, 0), **const),
            pl.BlockSpec((1, width_p), lambda b: (0, 0), **const),
            pl.BlockSpec((3, 3, width_p, width_p), lambda b: (0, 0, 0, 0), **const),
            pl.BlockSpec((1, width_p), lambda b: (0, 0), **const),
            pl.BlockSpec((width_p, out_ch_p), lambda b: (0, 0), **const),
            pl.BlockSpec((1, out_ch_p), lambda b: (0, 0), **const),
        ],
        out_specs=pl.BlockSpec((Bt, Hout, Wout, out_ch_p), lambda b: (b, 0, 0, 0)),
        scratch_shapes=[pltpu.VMEM((Bt, H + 2, W + 2, width_p), compute_dtype)],
        compiler_params=pltpu.CompilerParams(
            dimension_semantics=("parallel",),
            vmem_limit_bytes=_vmem_limit_bytes(
                Bt, H, W, Hout, Wout, Cin_p, width_p, out_ch_p,
                x.dtype, compute_dtype)),
    )(x, w1, b1, w2, b2, w3, b3)
    return out[..., :out_ch] if out_ch_p != out_ch else out


def bottleneck_forward(x_nchw, params, stride=1, skip_residual=False,
                       compute_dtype=jnp.bfloat16, batch_tile=None):
    # Thin NCHW compatibility wrapper (PyTorch layout). In a full model keep
    # everything NHWC (ideally bf16 activations) and hoist these transposes to
    # the model boundary.
    x = jnp.transpose(x_nchw, (0, 2, 3, 1))
    out = bottleneck_forward_nhwc(x, params, stride=stride,
                                  skip_residual=skip_residual,
                                  compute_dtype=compute_dtype,
                                  batch_tile=batch_tile)
    return jnp.transpose(out, (0, 3, 1, 2))


# ---------------------------------------------------------------------------
# Parameter init (inference-form BN) and a pure-JAX reference for verification
# ---------------------------------------------------------------------------

def init_bottleneck_params(key, inplanes, planes, base_width=64, groups=1):
    width = int(planes * (base_width / 64.0)) * groups
    out_ch = planes * 4
    ks = jax.random.split(key, 12)

    def nrm(k, shape, s=0.1):
        return s * jax.random.normal(k, shape, jnp.float32)

    return {
        # 1x1 -> (Cin, Cout);  3x3 -> (3, 3, Cin, Cout)
        "w1": nrm(ks[0], (inplanes, width)),
        "w2": nrm(ks[1], (3, 3, width, width)),
        "w3": nrm(ks[2], (width, out_ch)),
        # BN params (gamma, beta, running_mean, running_var)
        "bn1": (1.0 + nrm(ks[3], (width,)), nrm(ks[4], (width,)),
                nrm(ks[5], (width,)), 1.0 + jnp.abs(nrm(ks[6], (width,)))),
        "bn2": (1.0 + nrm(ks[7], (width,)), nrm(ks[8], (width,)),
                nrm(ks[9], (width,)), 1.0 + jnp.abs(nrm(ks[10], (width,)))),
        "bn3": (1.0 + nrm(ks[11], (out_ch,)), jnp.zeros((out_ch,)),
                jnp.zeros((out_ch,)), jnp.ones((out_ch,))),
    }


def ref_forward(x_nchw, params, stride=1, skip_residual=False):
    x = jnp.transpose(x_nchw, (0, 2, 3, 1))
    dn = ("NHWC", "HWIO", "NHWC")

    def bn(y, bnp):
        g, b, m, v = bnp
        return (y - m) / jnp.sqrt(v + 1e-5) * g + b

    w1 = params["w1"][None, None]
    w3 = params["w3"][None, None]
    out = jax.nn.relu(bn(lax.conv_general_dilated(x, w1, (1, 1), "VALID",
                                                  dimension_numbers=dn),
                         params["bn1"]))
    out = jax.nn.relu(bn(lax.conv_general_dilated(out, params["w2"],
                                                  (stride, stride),
                                                  ((1, 1), (1, 1)),
                                                  dimension_numbers=dn),
                         params["bn2"]))
    out = bn(lax.conv_general_dilated(out, w3, (1, 1), "VALID",
                                      dimension_numbers=dn), params["bn3"])
    if not skip_residual:
        out = out + x
    out = jax.nn.relu(out)
    return jnp.transpose(out, (0, 3, 1, 2))


# ---------------------------------------------------------------------------

if __name__ == "__main__":
    key = jax.random.PRNGKey(0)
    kx, kp = jax.random.split(key)

    B, planes, H, W = 2, 8, 8, 8
    inplanes = planes * 4          # identity residual valid (downsample=None)
    x = jax.random.normal(kx, (B, inplanes, H, W), jnp.float32)   # NCHW
    params = init_bottleneck_params(kp, inplanes, planes)

    ref = jax.block_until_ready(ref_forward(x, params))

    # Tight correctness check: full-f32 compute path (f32 scratch).
    out_f32 = jax.block_until_ready(
        bottleneck_forward(x, params, stride=1, skip_residual=False,
                           compute_dtype=jnp.float32))
    assert out_f32.shape == (B, inplanes, H, W)
    assert jnp.allclose(out_f32, ref, atol=1e-4, rtol=1e-4), \
        f"f32 max err {jnp.max(jnp.abs(out_f32 - ref))}"

    # Fast path: bf16 MXU inputs + bf16 halo scratch, f32 accumulation.
    out_bf16 = jax.block_until_ready(
        bottleneck_forward(x, params, stride=1, skip_residual=False,
                           compute_dtype=jnp.bfloat16))
    assert out_bf16.shape == (B, inplanes, H, W)
    assert jnp.allclose(out_bf16, ref, atol=1e-1, rtol=1e-1), \
        f"bf16 max err {jnp.max(jnp.abs(out_bf16 - ref))}"

    print("KERNEL_OK")
</pallas_src>

<mosaic_0001>
module attributes {stable_mosaic.version = 11 : i64} {
  func.func @_bottleneck_kernel(%arg0: i32, %arg1: memref<1x8x8x128xf32, #tpu.memory_space<vmem>>, %arg2: memref<128x128xf32, #tpu.memory_space<vmem>>, %arg3: memref<1x128xf32, #tpu.memory_space<vmem>>, %arg4: memref<3x3x128x128xf32, #tpu.memory_space<vmem>>, %arg5: memref<1x128xf32, #tpu.memory_space<vmem>>, %arg6: memref<128x128xf32, #tpu.memory_space<vmem>>, %arg7: memref<1x128xf32, #tpu.memory_space<vmem>>, %arg8: memref<1x8x8x128xf32, #tpu.memory_space<vmem>>, %arg9: memref<1x10x10x128xf32, #tpu.memory_space<vmem>>) attributes {dimension_semantics = [#tpu.dimension_semantics<parallel>], iteration_bounds = array<i64: 2>, scalar_prefetch = 0 : i64, scratch_operands = 1 : i64, tpu.core_type = #tpu.core_type<tc>, window_params = [{transform_indices = @transform_0, window_bounds = array<i64: 1, 8, 8, 128>}, {pipeline_mode = #tpu.pipeline_mode<synchronous>, transform_indices = @transform_1, window_bounds = array<i64: 128, 128>}, {pipeline_mode = #tpu.pipeline_mode<synchronous>, transform_indices = @transform_2, window_bounds = array<i64: 1, 128>}, {pipeline_mode = #tpu.pipeline_mode<synchronous>, transform_indices = @transform_3, window_bounds = array<i64: 3, 3, 128, 128>}, {pipeline_mode = #tpu.pipeline_mode<synchronous>, transform_indices = @transform_4, window_bounds = array<i64: 1, 128>}, {pipeline_mode = #tpu.pipeline_mode<synchronous>, transform_indices = @transform_5, window_bounds = array<i64: 128, 128>}, {pipeline_mode = #tpu.pipeline_mode<synchronous>, transform_indices = @transform_6, window_bounds = array<i64: 1, 128>}, {transform_indices = @transform_7, window_bounds = array<i64: 1, 8, 8, 128>}]} {
    %c0 = arith.constant 0 : index
    %c0_0 = arith.constant 0 : index
    %c0_1 = arith.constant 0 : index
    %c0_2 = arith.constant 0 : index
    %0 = vector.load %arg1[%c0, %c0_0, %c0_1, %c0_2] : memref<1x8x8x128xf32, #tpu.memory_space<vmem>>, vector<1x8x8x128xf32>
    %1 = vector.shape_cast %0 : vector<1x8x8x128xf32> to vector<64x128xf32>
    %c0_3 = arith.constant 0 : index
    %c0_4 = arith.constant 0 : index
    %2 = vector.load %arg2[%c0_3, %c0_4] : memref<128x128xf32, #tpu.memory_space<vmem>>, vector<128x128xf32>
    %cst = arith.constant dense<0.000000e+00> : vector<64x128xf32>
    %3 = tpu.matmul %1, %2, %cst {dimension_numbers = #tpu.dot_dimension_numbers<[1], [0], [0], [1], [0, 0, 1, 1], [], []>} : vector<64x128xf32>, vector<128x128xf32>, vector<64x128xf32> -> vector<64x128xf32>
    %c0_5 = arith.constant 0 : index
    %c0_6 = arith.constant 0 : index
    %4 = vector.load %arg3[%c0_5, %c0_6] : memref<1x128xf32, #tpu.memory_space<vmem>>, vector<1x128xf32>
    %5 = vector.broadcast %4 : vector<1x128xf32> to vector<64x128xf32>
    %6 = arith.addf %3, %5 : vector<64x128xf32>
    %cst_7 = arith.constant 0.000000e+00 : f32
    %7 = vector.broadcast %cst_7 : f32 to vector<64x128xf32>
    %8 = arith.maximumf %6, %7 : vector<64x128xf32>
    %cst_8 = arith.constant 0.000000e+00 : f32
    %9 = vector.broadcast %cst_8 : f32 to vector<1x1x10x128xf32>
    %cst_9 = arith.constant 0.000000e+00 : f32
    %10 = vector.broadcast %cst_9 : f32 to vector<1x10x1x128xf32>
    %c0_10 = arith.constant 0 : index
    %c0_11 = arith.constant 0 : index
    %c0_12 = arith.constant 0 : index
    %c0_13 = arith.constant 0 : index
    %11 = vector.load %arg9[%c0_10, %c0_11, %c0_12, %c0_13] : memref<1x10x10x128xf32, #tpu.memory_space<vmem>>, vector<1x1x10x128xf32>
    tpu.vector_store %arg9[%c0_10, %c0_11, %c0_12, %c0_13], %9 {strides = array<i32>} : memref<1x10x10x128xf32, #tpu.memory_space<vmem>>, vector<1x1x10x128xf32>,
    %c0_14 = arith.constant 0 : index
    %c9 = arith.constant 9 : index
    %c0_15 = arith.constant 0 : index
    %c0_16 = arith.constant 0 : index
    %12 = vector.load %arg9[%c0_14, %c9, %c0_15, %c0_16] : memref<1x10x10x128xf32, #tpu.memory_space<vmem>>, vector<1x1x10x128xf32>
    tpu.vector_store %arg9[%c0_14, %c9, %c0_15, %c0_16], %9 {strides = array<i32>} : memref<1x10x10x128xf32, #tpu.memory_space<vmem>>, vector<1x1x10x128xf32>,
    %c0_17 = arith.constant 0 : index
    %c0_18 = arith.constant 0 : index
    %c0_19 = arith.constant 0 : index
    %c0_20 = arith.constant 0 : index
    %13 = vector.load %arg9[%c0_17, %c0_18, %c0_19, %c0_20] : memref<1x10x10x128xf32, #tpu.memory_space<vmem>>, vector<1x10x1x128xf32>
    tpu.vector_store %arg9[%c0_17, %c0_18, %c0_19, %c0_20], %10 {strides = array<i32>} : memref<1x10x10x128xf32, #tpu.memory_space<vmem>>, vector<1x10x1x128xf32>,
    %c0_21 = arith.constant 0 : index
    %c0_22 = arith.constant 0 : index
    %c9_23 = arith.constant 9 : index
    %c0_24 = arith.constant 0 : index
    %14 = vector.load %arg9[%c0_21, %c0_22, %c9_23, %c0_24] : memref<1x10x10x128xf32, #tpu.memory_space<vmem>>, vector<1x10x1x128xf32>
    tpu.vector_store %arg9[%c0_21, %c0_22, %c9_23, %c0_24], %10 {strides = array<i32>} : memref<1x10x10x128xf32, #tpu.memory_space<vmem>>, vector<1x10x1x128xf32>,
    %15 = vector.shape_cast %8 : vector<64x128xf32> to vector<1x8x8x128xf32>
    %c0_25 = arith.constant 0 : index
    %c1 = arith.constant 1 : index
    %c1_26 = arith.constant 1 : index
    %c0_27 = arith.constant 0 : index
    %16 = vector.load %arg9[%c0_25, %c1, %c1_26, %c0_27] : memref<1x10x10x128xf32, #tpu.memory_space<vmem>>, vector<1x8x8x128xf32>
    tpu.vector_store %arg9[%c0_25, %c1, %c1_26, %c0_27], %15 {strides = array<i32>} : memref<1x10x10x128xf32, #tpu.memory_space<vmem>>, vector<1x8x8x128xf32>,
    %c0_28 = arith.constant 0 : index
    %c0_29 = arith.constant 0 : index
    %c0_30 = arith.constant 0 : index
    %c0_31 = arith.constant 0 : index
    %17 = vector.load %arg9[%c0_28, %c0_29, %c0_30, %c0_31] : memref<1x10x10x128xf32, #tpu.memory_space<vmem>>, vector<1x8x8x128xf32>
    %18 = vector.shape_cast %17 : vector<1x8x8x128xf32> to vector<64x128xf32>
    %c0_32 = arith.constant 0 : index
    %c0_33 = arith.constant 0 : index
    %c0_34 = arith.constant 0 : index
    %c0_35 = arith.constant 0 : index
    %19 = vector.load %arg4[%c0_32, %c0_33, %c0_34, %c0_35] : memref<3x3x128x128xf32, #tpu.memory_space<vmem>>, vector<1x1x128x128xf32>
    %20 = vector.shape_cast %19 : vector<1x1x128x128xf32> to vector<128x128xf32>
    %cst_36 = arith.constant dense<0.000000e+00> : vector<64x128xf32>
    %21 = tpu.matmul %18, %20, %cst_36 {dimension_numbers = #tpu.dot_dimension_numbers<[1], [0], [0], [1], [0, 0, 1, 1], [], []>} : vector<64x128xf32>, vector<128x128xf32>, vector<64x128xf32> -> vector<64x128xf32>
    %c0_37 = arith.constant 0 : index
    %c0_38 = arith.constant 0 : index
    %c1_39 = arith.constant 1 : index
    %c0_40 = arith.constant 0 : index
    %22 = vector.load %arg9[%c0_37, %c0_38, %c1_39, %c0_40] : memref<1x10x10x128xf32, #tpu.memory_space<vmem>>, vector<1x8x8x128xf32>
    %23 = vector.shape_cast %22 : vector<1x8x8x128xf32> to vector<64x128xf32>
    %c0_41 = arith.constant 0 : index
    %c1_42 = arith.constant 1 : index
    %c0_43 = arith.constant 0 : index
    %c0_44 = arith.constant 0 : index
    %24 = vector.load %arg4[%c0_41, %c1_42, %c0_43, %c0_44] : memref<3x3x128x128xf32, #tpu.memory_space<vmem>>, vector<1x1x128x128xf32>
    %25 = vector.shape_cast %24 : vector<1x1x128x128xf32> to vector<128x128xf32>
    %cst_45 = arith.constant dense<0.000000e+00> : vector<64x128xf32>
    %26 = tpu.matmul %23, %25, %cst_45 {dimension_numbers = #tpu.dot_dimension_numbers<[1], [0], [0], [1], [0, 0, 1, 1], [], []>} : vector<64x128xf32>, vector<128x128xf32>, vector<64x128xf32> -> vector<64x128xf32>
    %27 = arith.addf %21, %26 : vector<64x128xf32>
    %c0_46 = arith.constant 0 : index
    %c0_47 = arith.constant 0 : index
    %c2 = arith.constant 2 : index
    %c0_48 = arith.constant 0 : index
    %28 = vector.load %arg9[%c0_46, %c0_47, %c2, %c0_48] : memref<1x10x10x128xf32, #tpu.memory_space<vmem>>, vector<1x8x8x128xf32>
    %29 = vector.shape_cast %28 : vector<1x8x8x128xf32> to vector<64x128xf32>
    %c0_49 = arith.constant 0 : index
    %c2_50 = arith.constant 2 : index
    %c0_51 = arith.constant 0 : index
    %c0_52 = arith.constant 0 : index
    %30 = vector.load %arg4[%c0_49, %c2_50, %c0_51, %c0_52] : memref<3x3x128x128xf32, #tpu.memory_space<vmem>>, vector<1x1x128x128xf32>
    %31 = vector.shape_cast %30 : vector<1x1x128x128xf32> to vector<128x128xf32>
    %cst_53 = arith.constant dense<0.000000e+00> : vector<64x128xf32>
    %32 = tpu.matmul %29, %31, %cst_53 {dimension_numbers = #tpu.dot_dimension_numbers<[1], [0], [0], [1], [0, 0, 1, 1], [], []>} : vector<64x128xf32>, vector<128x128xf32>, vector<64x128xf32> -> vector<64x128xf32>
    %33 = arith.addf %27, %32 : vector<64x128xf32>
    %c0_54 = arith.constant 0 : index
    %c1_55 = arith.constant 1 : index
    %c0_56 = arith.constant 0 : index
    %c0_57 = arith.constant 0 : index
    %34 = vector.load %arg9[%c0_54, %c1_55, %c0_56, %c0_57] : memref<1x10x10x128xf32, #tpu.memory_space<vmem>>, vector<1x8x8x128xf32>
    %35 = vector.shape_cast %34 : vector<1x8x8x128xf32> to vector<64x128xf32>
    %c1_58 = arith.constant 1 : index
    %c0_59 = arith.constant 0 : index
    %c0_60 = arith.constant 0 : index
    %c0_61 = arith.constant 0 : index
    %36 = vector.load %arg4[%c1_58, %c0_59, %c0_60, %c0_61] : memref<3x3x128x128xf32, #tpu.memory_space<vmem>>, vector<1x1x128x128xf32>
    %37 = vector.shape_cast %36 : vector<1x1x128x128xf32> to vector<128x128xf32>
    %cst_62 = arith.constant dense<0.000000e+00> : vector<64x128xf32>
    %38 = tpu.matmul %35, %37, %cst_62 {dimension_numbers = #tpu.dot_dimension_numbers<[1], [0], [0], [1], [0, 0, 1, 1], [], []>} : vector<64x128xf32>, vector<128x128xf32>, vector<64x128xf32> -> vector<64x128xf32>
    %39 = arith.addf %33, %38 : vector<64x128xf32>
    %c0_63 = arith.constant 0 : index
    %c1_64 = arith.constant 1 : index
    %c1_65 = arith.constant 1 : index
    %c0_66 = arith.constant 0 : index
    %40 = vector.load %arg9[%c0_63, %c1_64, %c1_65, %c0_66] : memref<1x10x10x128xf32, #tpu.memory_space<vmem>>, vector<1x8x8x128xf32>
    %41 = vector.shape_cast %40 : vector<1x8x8x128xf32> to vector<64x128xf32>
    %c1_67 = arith.constant 1 : index
    %c1_68 = arith.constant 1 : index
    %c0_69 = arith.constant 0 : index
    %c0_70 = arith.constant 0 : index
    %42 = vector.load %arg4[%c1_67, %c1_68, %c0_69, %c0_70] : memref<3x3x128x128xf32, #tpu.memory_space<vmem>>, vector<1x1x128x128xf32>
    %43 = vector.shape_cast %42 : vector<1x1x128x128xf32> to vector<128x128xf32>
    %cst_71 = arith.constant dense<0.000000e+00> : vector<64x128xf32>
    %44 = tpu.matmul %41, %43, %cst_71 {dimension_numbers = #tpu.dot_dimension_numbers<[1], [0], [0], [1], [0, 0, 1, 1], [], []>} : vector<64x128xf32>, vector<128x128xf32>, vector<64x128xf32> -> vector<64x128xf32>
    %45 = arith.addf %39, %44 : vector<64x128xf32>
    %c0_72 = arith.constant 0 : index
    %c1_73 = arith.constant 1 : index
    %c2_74 = arith.constant 2 : index
    %c0_75 = arith.constant 0 : index
    %46 = vector.load %arg9[%c0_72, %c1_73, %c2_74, %c0_75] : memref<1x10x10x128xf32, #tpu.memory_space<vmem>>, vector<1x8x8x128xf32>
    %47 = vector.shape_cast %46 : vector<1x8x8x128xf32> to vector<64x128xf32>
    %c1_76 = arith.constant 1 : index
    %c2_77 = arith.constant 2 : index
    %c0_78 = arith.constant 0 : index
    %c0_79 = arith.constant 0 : index
    %48 = vector.load %arg4[%c1_76, %c2_77, %c0_78, %c0_79] : memref<3x3x128x128xf32, #tpu.memory_space<vmem>>, vector<1x1x128x128xf32>
    %49 = vector.shape_cast %48 : vector<1x1x128x128xf32> to vector<128x128xf32>
    %cst_80 = arith.constant dense<0.000000e+00> : vector<64x128xf32>
    %50 = tpu.matmul %47, %49, %cst_80 {dimension_numbers = #tpu.dot_dimension_numbers<[1], [0], [0], [1], [0, 0, 1, 1], [], []>} : vector<64x128xf32>, vector<128x128xf32>, vector<64x128xf32> -> vector<64x128xf32>
    %51 = arith.addf %45, %50 : vector<64x128xf32>
    %c0_81 = arith.constant 0 : index
    %c2_82 = arith.constant 2 : index
    %c0_83 = arith.constant 0 : index
    %c0_84 = arith.constant 0 : index
    %52 = vector.load %arg9[%c0_81, %c2_82, %c0_83, %c0_84] : memref<1x10x10x128xf32, #tpu.memory_space<vmem>>, vector<1x8x8x128xf32>
    %53 = vector.shape_cast %52 : vector<1x8x8x128xf32> to vector<64x128xf32>
    %c2_85 = arith.constant 2 : index
    %c0_86 = arith.constant 0 : index
    %c0_87 = arith.constant 0 : index
    %c0_88 = arith.constant 0 : index
    %54 = vector.load %arg4[%c2_85, %c0_86, %c0_87, %c0_88] : memref<3x3x128x128xf32, #tpu.memory_space<vmem>>, vector<1x1x128x128xf32>
    %55 = vector.shape_cast %54 : vector<1x1x128x128xf32> to vector<128x128xf32>
    %cst_89 = arith.constant dense<0.000000e+00> : vector<64x128xf32>
    %56 = tpu.matmul %53, %55, %cst_89 {dimension_numbers = #tpu.dot_dimension_numbers<[1], [0], [0], [1], [0, 0, 1, 1], [], []>} : vector<64x128xf32>, vector<128x128xf32>, vector<64x128xf32> -> vector<64x128xf32>
    %57 = arith.addf %51, %56 : vector<64x128xf32>
    %c0_90 = arith.constant 0 : index
    %c2_91 = arith.constant 2 : index
    %c1_92 = arith.constant 1 : index
    %c0_93 = arith.constant 0 : index
    %58 = vector.load %arg9[%c0_90, %c2_91, %c1_92, %c0_93] : memref<1x10x10x128xf32, #tpu.memory_space<vmem>>, vector<1x8x8x128xf32>
    %59 = vector.shape_cast %58 : vector<1x8x8x128xf32> to vector<64x128xf32>
    %c2_94 = arith.constant 2 : index
    %c1_95 = arith.constant 1 : index
    %c0_96 = arith.constant 0 : index
    %c0_97 = arith.constant 0 : index
    %60 = vector.load %arg4[%c2_94, %c1_95, %c0_96, %c0_97] : memref<3x3x128x128xf32, #tpu.memory_space<vmem>>, vector<1x1x128x128xf32>
    %61 = vector.shape_cast %60 : vector<1x1x128x128xf32> to vector<128x128xf32>
    %cst_98 = arith.constant dense<0.000000e+00> : vector<64x128xf32>
    %62 = tpu.matmul %59, %61, %cst_98 {dimension_numbers = #tpu.dot_dimension_numbers<[1], [0], [0], [1], [0, 0, 1, 1], [], []>} : vector<64x128xf32>, vector<128x128xf32>, vector<64x128xf32> -> vector<64x128xf32>
    %63 = arith.addf %57, %62 : vector<64x128xf32>
    %c0_99 = arith.constant 0 : index
    %c2_100 = arith.constant 2 : index
    %c2_101 = arith.constant 2 : index
    %c0_102 = arith.constant 0 : index
    %64 = vector.load %arg9[%c0_99, %c2_100, %c2_101, %c0_102] : memref<1x10x10x128xf32, #tpu.memory_space<vmem>>, vector<1x8x8x128xf32>
    %65 = vector.shape_cast %64 : vector<1x8x8x128xf32> to vector<64x128xf32>
    %c2_103 = arith.constant 2 : index
    %c2_104 = arith.constant 2 : index
    %c0_105 = arith.constant 0 : index
    %c0_106 = arith.constant 0 : index
    %66 = vector.load %arg4[%c2_103, %c2_104, %c0_105, %c0_106] : memref<3x3x128x128xf32, #tpu.memory_space<vmem>>, vector<1x1x128x128xf32>
    %67 = vector.shape_cast %66 : vector<1x1x128x128xf32> to vector<128x128xf32>
    %cst_107 = arith.constant dense<0.000000e+00> : vector<64x128xf32>
    %68 = tpu.matmul %65, %67, %cst_107 {dimension_numbers = #tpu.dot_dimension_numbers<[1], [0], [0], [1], [0, 0, 1, 1], [], []>} : vector<64x128xf32>, vector<128x128xf32>, vector<64x128xf32> -> vector<64x128xf32>
    %69 = arith.addf %63, %68 : vector<64x128xf32>
    %c0_108 = arith.constant 0 : index
    %c0_109 = arith.constant 0 : index
    %70 = vector.load %arg5[%c0_108, %c0_109] : memref<1x128xf32, #tpu.memory_space<vmem>>, vector<1x128xf32>
    %71 = vector.broadcast %70 : vector<1x128xf32> to vector<64x128xf32>
    %72 = arith.addf %69, %71 : vector<64x128xf32>
    %cst_110 = arith.constant 0.000000e+00 : f32
    %73 = vector.broadcast %cst_110 : f32 to vector<64x128xf32>
    %74 = arith.maximumf %72, %73 : vector<64x128xf32>
    %c0_111 = arith.constant 0 : index
    %c0_112 = arith.constant 0 : index
    %75 = vector.load %arg6[%c0_111, %c0_112] : memref<128x128xf32, #tpu.memory_space<vmem>>, vector<128x128xf32>
    %cst_113 = arith.constant dense<0.000000e+00> : vector<64x128xf32>
    %76 = tpu.matmul %74, %75, %cst_113 {dimension_numbers = #tpu.dot_dimension_numbers<[1], [0], [0], [1], [0, 0, 1, 1], [], []>} : vector<64x128xf32>, vector<128x128xf32>, vector<64x128xf32> -> vector<64x128xf32>
    %c0_114 = arith.constant 0 : index
    %c0_115 = arith.constant 0 : index
    %77 = vector.load %arg7[%c0_114, %c0_115] : memref<1x128xf32, #tpu.memory_space<vmem>>, vector<1x128xf32>
    %78 = vector.broadcast %77 : vector<1x128xf32> to vector<64x128xf32>
    %79 = arith.addf %76, %78 : vector<64x128xf32>
    %80 = vector.shape_cast %0 : vector<1x8x8x128xf32> to vector<64x128xf32>
    %81 = arith.addf %79, %80 : vector<64x128xf32>
    %cst_116 = arith.constant 0.000000e+00 : f32
    %82 = vector.broadcast %cst_116 : f32 to vector<64x128xf32>
    %83 = arith.maximumf %81, %82 : vector<64x128xf32>
    %84 = vector.shape_cast %83 : vector<64x128xf32> to vector<1x8x8x128xf32>
    %c0_117 = arith.constant 0 : index
    %c0_118 = arith.constant 0 : index
    %c0_119 = arith.constant 0 : index
    %c0_120 = arith.constant 0 : index
    %85 = vector.load %arg8[%c0_117, %c0_118, %c0_119, %c0_120] : memref<1x8x8x128xf32, #tpu.memory_space<vmem>>, vector<1x8x8x128xf32>
    tpu.vector_store %arg8[%c0_117, %c0_118, %c0_119, %c0_120], %84 {strides = array<i32>} : memref<1x8x8x128xf32, #tpu.memory_space<vmem>>, vector<1x8x8x128xf32>,
    return
  }
  func.func @transform_0(%arg0: i32) -> (i32, i32, i32, i32) {
    %c0_i32 = arith.constant 0 : i32
    %c0_i32_0 = arith.constant 0 : i32
    %c0_i32_1 = arith.constant 0 : i32
    %c0_i32_2 = arith.constant 0 : i32
    return %arg0, %c0_i32, %c0_i32_0, %c0_i32_1 : i32, i32, i32, i32
  }
  func.func @transform_1(%arg0: i32) -> (i32, i32) {
    %c0_i32 = arith.constant 0 : i32
    %c0_i32_0 = arith.constant 0 : i32
    %c0_i32_1 = arith.constant 0 : i32
    return %c0_i32, %c0_i32_0 : i32, i32
  }
  func.func @transform_2(%arg0: i32) -> (i32, i32) {
    %c0_i32 = arith.constant 0 : i32
    %c0_i32_0 = arith.constant 0 : i32
    %c0_i32_1 = arith.constant 0 : i32
    return %c0_i32, %c0_i32_0 : i32, i32
  }
  func.func @transform_3(%arg0: i32) -> (i32, i32, i32, i32) {
    %c0_i32 = arith.constant 0 : i32
    %c0_i32_0 = arith.constant 0 : i32
    %c0_i32_1 = arith.constant 0 : i32
    %c0_i32_2 = arith.constant 0 : i32
    %c0_i32_3 = arith.constant 0 : i32
    return %c0_i32, %c0_i32_0, %c0_i32_1, %c0_i32_2 : i32, i32, i32, i32
  }
  func.func @transform_4(%arg0: i32) -> (i32, i32) {
    %c0_i32 = arith.constant 0 : i32
    %c0_i32_0 = arith.constant 0 : i32
    %c0_i32_1 = arith.constant 0 : i32
    return %c0_i32, %c0_i32_0 : i32, i32
  }
  func.func @transform_5(%arg0: i32) -> (i32, i32) {
    %c0_i32 = arith.constant 0 : i32
    %c0_i32_0 = arith.constant 0 : i32
    %c0_i32_1 = arith.constant 0 : i32
    return %c0_i32, %c0_i32_0 : i32, i32
  }
  func.func @transform_6(%arg0: i32) -> (i32, i32) {
    %c0_i32 = arith.constant 0 : i32
    %c0_i32_0 = arith.constant 0 : i32
    %c0_i32_1 = arith.constant 0 : i32
    return %c0_i32, %c0_i32_0 : i32, i32
  }
  func.func @transform_7(%arg0: i32) -> (i32, i32, i32, i32) {
    %c0_i32 = arith.constant 0 : i32
    %c0_i32_0 = arith.constant 0 : i32
    %c0_i32_1 = arith.constant 0 : i32
    %c0_i32_2 = arith.constant 0 : i32
    return %arg0, %c0_i32, %c0_i32_0, %c0_i32_1 : i32, i32, i32, i32
  }
}

</mosaic_0001>

<llo_original>
// kernel: tpu_custom_call.1
$region0: #{tpu_custom_call.1}
  #allocation0 [shape = 'u32[]', space=smem, size = 0x4, offset = 0x4, fixed_abs, tag = 'smem constant byte address 0x4 - core index']
  #allocation1 [shape = 'u32[144,128]{1,0:T(1,128)}', space=vmem, size = 0x12000, scoped, tag = 'internal scratch']
  #allocation2 [shape = 'f32[1,10,10,128]{3,2,1,0:T(8,128)}', space=vmem, size = 0x14000, scoped, tag = 'scratch operand']
  %s0 = inlined_call_operand.hbm [shape: f32[2,8,8,128], index: 0, kind: input, shape index: {}]
  %s1 = inlined_call_operand.hbm [shape: f32[128,128], index: 1, kind: input, shape index: {}]
  %s2 = inlined_call_operand.vmem [shape: f32[1,128], index: 2, kind: input, shape index: {}]
  %s3 = inlined_call_operand.hbm [shape: f32[3,3,128,128], index: 3, kind: input, shape index: {}]
  %s4 = inlined_call_operand.vmem [shape: f32[1,128], index: 4, kind: input, shape index: {}]
  %s5 = inlined_call_operand.hbm [shape: f32[128,128], index: 5, kind: input, shape index: {}]
  %s6 = inlined_call_operand.vmem [shape: f32[1,128], index: 6, kind: input, shape index: {}]
  %s7 = inlined_call_operand.hbm [shape: f32[2,8,8,128], index: 7, kind: output, shape index: {}]
  %s8 = sld [smem:[#allocation0]]
  $region77: #{tpu_custom_call.1} parent=0
    _
  %s10 = ssub.s32 1, %s8
  %s11 = scalar_select 0, %s10, %s8
  $region1: #{tpu_custom_call.1} parent=0
    #allocation3 [shape = 'u8[65536]{0}', space=vmem, size = 0x10000, scoped, tag = 'input window, operand 0']
    #allocation4 [shape = 's32[2]{0}', space=sflag, size = 0x8, scoped, tag = 'scoped memory for tpu_custom_call.1']
    #allocation5 [shape = 's32[2]{0}', space=sflag, size = 0x8, scoped, tag = 'scoped memory for tpu_custom_call.1']
    #allocation6 [shape = 'u8[65536]{0}', space=vmem, size = 0x10000, scoped, tag = 'input window, operand 1, single buffered']
    #allocation7 [shape = 's32[1]{0}', space=sflag, size = 0x4, scoped, tag = 'scoped memory for tpu_custom_call.1']
    #allocation8 [shape = 'u8[589824]{0}', space=vmem, size = 0x90000, scoped, tag = 'input window, operand 3, single buffered']
    #allocation9 [shape = 'u8[65536]{0}', space=vmem, size = 0x10000, scoped, tag = 'input window, operand 5, single buffered']
    #allocation10 [shape = 's32[1]{0}', space=sflag, size = 0x4, scoped, tag = 'scoped memory for tpu_custom_call.1']
    #allocation11 [shape = 'u8[65536]{0}', space=vmem, size = 0x10000, scoped, tag = 'output window, operand 0']
    %12 = vsyncpa [#allocation4], 0
    %s13 = scalar_lea.sflag [#allocation4], 1
    %14 = vsyncpa %s13, 0
    %15 = vsyncpa [#allocation7], 0
    %16 = vsyncpa [#allocation10], 0
    %17 = vsyncpa [#allocation5], 0
    %s18 = scalar_lea.sflag [#allocation5], 1
    %19 = vsyncpa %s18, 0
    loop: start=0, step=1, limit=4
    $region2: #{tpu_custom_call.1} parent=1 // loop_pre_header
      _
    $region3: #{tpu_custom_call.1} parent=1 // loop_header
      %s21 = sphi 0, %s25
      %p22 = scmp.ge.s32.totalorder %s21, 4
      %s31 = sphi 0, %s33
      %s34 = sphi 0, %s31
      %s35 = sphi 0, %s34
      %s51 = sphi 0, %s35
      %s55 = sphi 0, %s55
      %s57 = sphi 0, %s55
      %s58 = sphi 0, %s57
      %s72 = sphi 0, %s58
      %s76 = sphi 0, %s76
      %s78 = sphi 0, %s76
      %s79 = sphi 0, %s78
      %s93 = sphi 0, %s79
      %s97 = sphi 0, %s97
      %s99 = sphi 0, %s97
      %s100 = sphi 0, %s99
      %s114 = sphi 0, %s100
      %s118 = sphi 0, %s118
      %s120 = sphi 0, %s118
      %s121 = sphi 0, %s120
      %s135 = sphi 0, %s121
      %s139 = sphi 0, %s139
      %s141 = sphi 0, %s139
      %s142 = sphi 0, %s141
      %s156 = sphi 0, %s142
      %s160 = sphi 0, %s160
      %s162 = sphi 0, %s160
      %s163 = sphi 0, %s162
      %s177 = sphi 0, %s163
      %s183 = sphi 0, %s185
      %s186 = sphi 0, %s183
      %s187 = sphi 0, %s186
      %s203 = sphi 0, %s187
    $region4: #{tpu_custom_call.1} parent=1 // loop_header_branch
      %24 = sbr.rel (%p22) target = $region8
    $region5: #{tpu_custom_call.1} parent=1 // loop_body
      %s26 = ssub.s32 %s21, 1
      %s27 = ssub.s32 %s21, 2
      %s28 = sadd.s32 %s21, 1
      %s29 = ssub.s32 %s21, %s28
      %p30 = scmp.eq.s32.totalorder %s29, 0
      %s32 = sadd.s32 %s31, 1
      %s33 = scalar_select %p30, %s31, %s32
      %p36 = pneg %p30
      %p37 = scmp.eq.s32.totalorder %s21, 1
      %p38 = por %p36, %p37
      %p39 = scmp.ne.s32.totalorder %s31, %s34
      %p40 = scmp.eq.s32.totalorder %s21, 0
      %p41 = por %p39, %p40
      %p42 = scmp.ne.s32.totalorder %s31, %s34
      %p43 = scmp.eq.s32.totalorder %s26, 1
      %p44 = por %p42, %p43
      %p45 = scmp.ne.s32.totalorder %s34, %s35
      %p46 = scmp.eq.s32.totalorder %s26, 0
      %p47 = por %p45, %p46
      %p48 = scmp.ne.s32.totalorder %s34, %s35
      %p49 = scmp.eq.s32.totalorder %s27, 1
      %p50 = por %p48, %p49
      %p52 = scmp.ne.s32.totalorder %s35, %s51
      %p53 = scmp.eq.s32.totalorder %s27, 0
      %p54 = por %p52, %p53
      %s56 = sadd.s32 %s55, 1
      %p59 = scmp.eq.s32.totalorder %s21, 1
      %p60 = scmp.ne.s32.totalorder %s55, %s57
      %p61 = scmp.eq.s32.totalorder %s21, 0
      %p62 = por %p60, %p61
      %p63 = scmp.ne.s32.totalorder %s55, %s57
      %p64 = scmp.eq.s32.totalorder %s26, 1
      %p65 = por %p63, %p64
      %p66 = scmp.ne.s32.totalorder %s57, %s58
      %p67 = scmp.eq.s32.totalorder %s26, 0
      %p68 = por %p66, %p67
      %p69 = scmp.ne.s32.totalorder %s57, %s58
      %p70 = scmp.eq.s32.totalorder %s27, 1
      %p71 = por %p69, %p70
      %p73 = scmp.ne.s32.totalorder %s58, %s72
      %p74 = scmp.eq.s32.totalorder %s27, 0
      %p75 = por %p73, %p74
      %s77 = sadd.s32 %s76, 1
      %p80 = scmp.eq.s32.totalorder %s21, 1
      %p81 = scmp.ne.s32.totalorder %s76, %s78
      %p82 = scmp.eq.s32.totalorder %s21, 0
      %p83 = por %p81, %p82
      %p84 = scmp.ne.s32.totalorder %s76, %s78
      %p85 = scmp.eq.s32.totalorder %s26, 1
      %p86 = por %p84, %p85
      %p87 = scmp.ne.s32.totalorder %s78, %s79
      %p88 = scmp.eq.s32.totalorder %s26, 0
      %p89 = por %p87, %p88
      %p90 = scmp.ne.s32.totalorder %s78, %s79
      %p91 = scmp.eq.s32.totalorder %s27, 1
      %p92 = por %p90, %p91
      %p94 = scmp.ne.s32.totalorder %s79, %s93
      %p95 = scmp.eq.s32.totalorder %s27, 0
      %p96 = por %p94, %p95
      %s98 = sadd.s32 %s97, 1
      %p101 = scmp.eq.s32.totalorder %s21, 1
      %p102 = scmp.ne.s32.totalorder %s97, %s99
      %p103 = scmp.eq.s32.totalorder %s21, 0
      %p104 = por %p102, %p103
      %p105 = scmp.ne.s32.totalorder %s97, %s99
      %p106 = scmp.eq.s32.totalorder %s26, 1
      %p107 = por %p105, %p106
      %p108 = scmp.ne.s32.totalorder %s99, %s100
      %p109 = scmp.eq.s32.totalorder %s26, 0
      %p110 = por %p108, %p109
      %p111 = scmp.ne.s32.totalorder %s99, %s100
      %p112 = scmp.eq.s32.totalorder %s27, 1
      %p113 = por %p111, %p112
      %p115 = scmp.ne.s32.totalorder %s100, %s114
      %p116 = scmp.eq.s32.totalorder %s27, 0
      %p117 = por %p115, %p116
      %s119 = sadd.s32 %s118, 1
      %p122 = scmp.eq.s32.totalorder %s21, 1
      %p123 = scmp.ne.s32.totalorder %s118, %s120
      %p124 = scmp.eq.s32.totalorder %s21, 0
      %p125 = por %p123, %p124
      %p126 = scmp.ne.s32.totalorder %s118, %s120
      %p127 = scmp.eq.s32.totalorder %s26, 1
      %p128 = por %p126, %p127
      %p129 = scmp.ne.s32.totalorder %s120, %s121
      %p130 = scmp.eq.s32.totalorder %s26, 0
      %p131 = por %p129, %p130
      %p132 = scmp.ne.s32.totalorder %s120, %s121
      %p133 = scmp.eq.s32.totalorder %s27, 1
      %p134 = por %p132, %p133
      %p136 = scmp.ne.s32.totalorder %s121, %s135
      %p137 = scmp.eq.s32.totalorder %s27, 0
      %p138 = por %p136, %p137
      %s140 = sadd.s32 %s139, 1
      %p143 = scmp.eq.s32.totalorder %s21, 1
      %p144 = scmp.ne.s32.totalorder %s139, %s141
      %p145 = scmp.eq.s32.totalorder %s21, 0
      %p146 = por %p144, %p145
      %p147 = scmp.ne.s32.totalorder %s139, %s141
      %p148 = scmp.eq.s32.totalorder %s26, 1
      %p149 = por %p147, %p148
      %p150 = scmp.ne.s32.totalorder %s141, %s142
      %p151 = scmp.eq.s32.totalorder %s26, 0
      %p152 = por %p150, %p151
      %p153 = scmp.ne.s32.totalorder %s141, %s142
      %p154 = scmp.eq.s32.totalorder %s27, 1
      %p155 = por %p153, %p154
      %p157 = scmp.ne.s32.totalorder %s142, %s156
      %p158 = scmp.eq.s32.totalorder %s27, 0
      %p159 = por %p157, %p158
      %s161 = sadd.s32 %s160, 1
      %p164 = scmp.eq.s32.totalorder %s21, 1
      %p165 = scmp.ne.s32.totalorder %s160, %s162
      %p166 = scmp.eq.s32.totalorder %s21, 0
      %p167 = por %p165, %p166
      %p168 = scmp.ne.s32.totalorder %s160, %s162
      %p169 = scmp.eq.s32.totalorder %s26, 1
      %p170 = por %p168, %p169
      %p171 = scmp.ne.s32.totalorder %s162, %s163
      %p172 = scmp.eq.s32.totalorder %s26, 0
      %p173 = por %p171, %p172
      %p174 = scmp.ne.s32.totalorder %s162, %s163
      %p175 = scmp.eq.s32.totalorder %s27, 1
      %p176 = por %p174, %p175
      %p178 = scmp.ne.s32.totalorder %s163, %s177
      %p179 = scmp.eq.s32.totalorder %s27, 0
      %p180 = por %p178, %p179
      %s181 = ssub.s32 %s21, %s28
      %p182 = scmp.eq.s32.totalorder %s181, 0
      %s184 = sadd.s32 %s183, 1
      %s185 = scalar_select %p182, %s183, %s184
      %p188 = pneg %p182
      %p189 = scmp.eq.s32.totalorder %s21, 1
      %p190 = por %p188, %p189
      %p191 = scmp.ne.s32.totalorder %s183, %s186
      %p192 = scmp.eq.s32.totalorder %s21, 0
      %p193 = por %p191, %p192
      %p194 = scmp.ne.s32.totalorder %s183, %s186
      %p195 = scmp.eq.s32.totalorder %s26, 1
      %p196 = por %p194, %p195
      %p197 = scmp.ne.s32.totalorder %s186, %s187
      %p198 = scmp.eq.s32.totalorder %s26, 0
      %p199 = por %p197, %p198
      %p200 = scmp.ne.s32.totalorder %s186, %s187
      %p201 = scmp.eq.s32.totalorder %s27, 1
      %p202 = por %p200, %p201
      %p204 = scmp.ne.s32.totalorder %s187, %s203
      %p205 = scmp.eq.s32.totalorder %s27, 0
      %p206 = por %p204, %p205
      %p207 = scmp.le.s32.totalorder 1, %s21
      %p208 = scmp.lt.s32.totalorder %s21, 3
      %p209 = pnand %p207, %p208
      %p210 = pneg %p209
      // Predicated region
      $region9: #{tpu_custom_call.1} parent=5 // pred_check
        _
      $region10: #{tpu_custom_call.1} parent=5 // pred_check_branch
        %212 = sbr.rel (%p209) target = $region12
      $region11: #{tpu_custom_call.1} parent=5 // pred_region
        %s213 = ssub.s32 %s21, 1
        // Predicated region
        $region13: #{tpu_custom_call.1} parent=11 // pred_check
          %p214 = pneg %p68
        $region14: #{tpu_custom_call.1} parent=11 // pred_check_branch
          %216 = sbr.rel (%p214) target = $region16
        $region15: #{tpu_custom_call.1} parent=11 // pred_region
          %s218 = ssub.s32 2048, 2048
          %219 = vsyncadd [#allocation7], %s218
          %s220 = sshll.u32 [#allocation6], 4
          %s221 = int_to_ptr.vmem [resolvable:$true] %s220
          %226 = dma.hbm_to_vmem [thread:$0]  %s1, 2048, %s221, [#allocation7], 128, 128, 8
        $region16: #{tpu_custom_call.1} parent=11 // pred_fallthru
          _
        // Predicated region
        $region17: #{tpu_custom_call.1} parent=11 // pred_check
          %p227 = pneg %p89
        $region18: #{tpu_custom_call.1} parent=11 // pred_check_branch
          %229 = sbr.rel (%p227) target = $region20
        $region19: #{tpu_custom_call.1} parent=11 // pred_region
          _
        $region20: #{tpu_custom_call.1} parent=11 // pred_fallthru
          _
        // Predicated region
        $region21: #{tpu_custom_call.1} parent=11 // pred_check
          %p230 = pneg %p110
        $region22: #{tpu_custom_call.1} parent=11 // pred_check_branch
          %232 = sbr.rel (%p230) target = $region24
        $region23: #{tpu_custom_call.1} parent=11 // pred_region
          %s234 = ssub.s32 18432, 18432
          %235 = vsyncadd [#allocation7], %s234
          %s236 = sshll.u32 [#allocation8], 4
          %s237 = int_to_ptr.vmem [resolvable:$true] %s236
          %242 = dma.hbm_to_vmem [thread:$0]  %s3, 18432, %s237, [#allocation7], 128, 128, 8
        $region24: #{tpu_custom_call.1} parent=11 // pred_fallthru
          _
        // Predicated region
        $region25: #{tpu_custom_call.1} parent=11 // pred_check
          %p243 = pneg %p131
        $region26: #{tpu_custom_call.1} parent=11 // pred_check_branch
          %245 = sbr.rel (%p243) target = $region28
        $region27: #{tpu_custom_call.1} parent=11 // pred_region
          _
        $region28: #{tpu_custom_call.1} parent=11 // pred_fallthru
          _
        // Predicated region
        $region29: #{tpu_custom_call.1} parent=11 // pred_check
          %p246 = pneg %p152
        $region30: #{tpu_custom_call.1} parent=11 // pred_check_branch
          %248 = sbr.rel (%p246) target = $region32
        $region31: #{tpu_custom_call.1} parent=11 // pred_region
          %s250 = ssub.s32 2048, 2048
          %251 = vsyncadd [#allocation10], %s250
          %s252 = sshll.u32 [#allocation9], 4
          %s253 = int_to_ptr.vmem [resolvable:$true] %s252
          %258 = dma.hbm_to_vmem [thread:$0]  %s5, 2048, %s253, [#allocation10], 128, 128, 8
        $region32: #{tpu_custom_call.1} parent=11 // pred_fallthru
          _
        // Predicated region
        $region33: #{tpu_custom_call.1} parent=11 // pred_check
          %p259 = pneg %p173
        $region34: #{tpu_custom_call.1} parent=11 // pred_check_branch
          %261 = sbr.rel (%p259) target = $region36
        $region35: #{tpu_custom_call.1} parent=11 // pred_region
          _
        $region36: #{tpu_custom_call.1} parent=11 // pred_fallthru
          _
      $region12: #{tpu_custom_call.1} parent=5 // pred_fallthru
        _
      %p262 = scmp.lt.s32.totalorder %s21, 2
      // Predicated region
      $region37: #{tpu_custom_call.1} parent=5 // pred_check
        %p263 = pneg %p262
      $region38: #{tpu_custom_call.1} parent=5 // pred_check_branch
        %265 = sbr.rel (%p263) target = $region40
      $region39: #{tpu_custom_call.1} parent=5 // pred_region
        // Predicated region
        $region41: #{tpu_custom_call.1} parent=39 // pred_check
          %p266 = pneg %p41
        $region42: #{tpu_custom_call.1} parent=39 // pred_check_branch
          %268 = sbr.rel (%p266) target = $region44
        $region43: #{tpu_custom_call.1} parent=39 // pred_region
          %s269 = sand.u32 %s31, 1
          %s270 = scalar_lea.sflag [#allocation4], %s269
          %s271 = sand.u32 %s31, 1
          %s272 = smul.addr %s271, 64
          %s273 = scalar_lea.vmem [#allocation3], %s272
          %s275 = ssub.s32 1024, 1024
          %276 = vsyncadd %s270, %s275
          %s277 = smul.addr %s21, 8
          %s278 = smul.addr %s277, 128
          %s279 = scalar_lea.hbm %s0, %s278
          %s280 = sshll.u32 %s273, 4
          %s281 = int_to_ptr.vmem [resolvable:$true] %s280
          %286 = dma.hbm_to_vmem [thread:$0]  %s279, 1024, %s281, %s270, 128, 128, 8
        $region44: #{tpu_custom_call.1} parent=39 // pred_fallthru
          _
      $region40: #{tpu_custom_call.1} parent=5 // pred_fallthru
        _
      %p287 = scmp.le.s32.totalorder 1, %s21
      %p288 = scmp.lt.s32.totalorder %s21, 3
      %p289 = pnand %p287, %p288
      %p290 = pneg %p289
      // Predicated region
      $region45: #{tpu_custom_call.1} parent=5 // pred_check
        _
      $region46: #{tpu_custom_call.1} parent=5 // pred_check_branch
        %292 = sbr.rel (%p289) target = $region48
      $region47: #{tpu_custom_call.1} parent=5 // pred_region
        %s293 = ssub.s32 %s21, 1
        %s294 = sand.u32 %s34, 1
        %s295 = scalar_lea.sflag [#allocation4], %s294
        %s296 = sand.u32 %s34, 1
        %s297 = smul.addr %s296, 64
        %s298 = scalar_lea.vmem [#allocation3], %s297
        // Predicated region
        $region49: #{tpu_custom_call.1} parent=47 // pred_check
          %p299 = pneg %p47
        $region50: #{tpu_custom_call.1} parent=47 // pred_check_branch
          %301 = sbr.rel (%p299) target = $region52
        $region51: #{tpu_custom_call.1} parent=47 // pred_region
          %302 = dma.done %s295, 1024
        $region52: #{tpu_custom_call.1} parent=47 // pred_fallthru
          _
        // Predicated region
        $region53: #{tpu_custom_call.1} parent=47 // pred_check
          %p303 = pneg %p68
        $region54: #{tpu_custom_call.1} parent=47 // pred_check_branch
          %305 = sbr.rel (%p303) target = $region56
        $region55: #{tpu_custom_call.1} parent=47 // pred_region
          %306 = dma.done [#allocation7], 2048
        $region56: #{tpu_custom_call.1} parent=47 // pred_fallthru
          _
        // Predicated region
        $region57: #{tpu_custom_call.1} parent=47 // pred_check
          %p307 = pneg %p110
        $region58: #{tpu_custom_call.1} parent=47 // pred_check_branch
          %309 = sbr.rel (%p307) target = $region60
        $region59: #{tpu_custom_call.1} parent=47 // pred_region
          %310 = dma.done [#allocation7], 18432
        $region60: #{tpu_custom_call.1} parent=47 // pred_fallthru
          _
        // Predicated region
        $region61: #{tpu_custom_call.1} parent=47 // pred_check
          %p311 = pneg %p152
        $region62: #{tpu_custom_call.1} parent=47 // pred_check_branch
          %313 = sbr.rel (%p311) target = $region64
        $region63: #{tpu_custom_call.1} parent=47 // pred_region
          %314 = dma.done [#allocation10], 2048
        $region64: #{tpu_custom_call.1} parent=47 // pred_fallthru
          _
        %s315 = sand.u32 %s34, 1
        %s316 = scalar_lea.sflag [#allocation4], %s315
        %s317 = sand.u32 %s34, 1
        %s318 = smul.addr %s317, 64
        %s319 = scalar_lea.vmem [#allocation3], %s318
        %p320 = pneg %p47
        %p321 = pneg %p44
        %p322 = pneg %p68
        %p323 = pneg %p65
        %p324 = pneg %p89
        %p325 = pneg %p86
        %p326 = pneg %p110
        %p327 = pneg %p107
        %p328 = pneg %p131
        %p329 = pneg %p128
        %p330 = pneg %p152
        %p331 = pneg %p149
        %p332 = pneg %p173
        %p333 = pneg %p170
        %p334 = pneg %p199
        %p335 = pneg %p196
        %s336 = sand.u32 %s186, 1
        %s337 = scalar_lea.sflag [#allocation5], %s336
        %s338 = sand.u32 %s186, 1
        %s339 = smul.addr %s338, 64
        %s340 = scalar_lea.vmem [#allocation11], %s339
        %v341 = vld [vmem:[%s298] sm:$0xff]
        %v342 = vld [vmem:[%s298 + $0x8] sm:$0xff]
        %v343 = vld [vmem:[%s298 + $0x10] sm:$0xff]
        %v344 = vld [vmem:[%s298 + $0x18] sm:$0xff]
        %v345 = vld [vmem:[%s298 + $0x20] sm:$0xff]
        %v346 = vld [vmem:[%s298 + $0x28] sm:$0xff]
        %v347 = vld [vmem:[%s298 + $0x30] sm:$0xff]
        %v348 = vld [vmem:[%s298 + $0x38] sm:$0xff]
        %v349 = vld [vmem:[#allocation6] sm:$0xff]
        %v350 = vld [vmem:[#allocation6 + $0x8] sm:$0xff]
        %v351 = vld [vmem:[#allocation6 + $0x10] sm:$0xff]
        %v352 = vld [vmem:[#allocation6 + $0x18] sm:$0xff]
        %v353 = vld [vmem:[#allocation6 + $0x20] sm:$0xff]
        %v354 = vld [vmem:[#allocation6 + $0x28] sm:$0xff]
        %v355 = vld [vmem:[#allocation6 + $0x30] sm:$0xff]
        %v356 = vld [vmem:[#allocation6 + $0x38] sm:$0xff]
        %v357 = vld [vmem:[#allocation6 + $0x40] sm:$0xff]
        %v358 = vld [vmem:[#allocation6 + $0x48] sm:$0xff]
        %v359 = vld [vmem:[#allocation6 + $0x50] sm:$0xff]
        %v360 = vld [vmem:[#allocation6 + $0x58] sm:$0xff]
        %v361 = vld [vmem:[#allocation6 + $0x60] sm:$0xff]
        %v362 = vld [vmem:[#allocation6 + $0x68] sm:$0xff]
        %v363 = vld [vmem:[#allocation6 + $0x70] sm:$0xff]
        %v364 = vld [vmem:[#allocation6 + $0x78] sm:$0xff]
        %v365 = vld [vmem:[%s2] sm:$0x1]
        %v367 = vlaneseq
        %v368 = vshrl.u32 %v367, 7
        %v369 = vsub.s32 0, %v368
        %v370 = vrot.slane %v365, %v369
        %372 = vmatprep.subr.mxu0 0.0
        %373 = vmatpush1.msra.mxu0 %v349
        %374 = vmatprep.subr.mxu0 0.0
        %375 = vmatpush1.msra.mxu0 %v350
        %376 = vmatprep.subr.mxu0 0.0
        %377 = vmatpush1.msra.mxu0 %v351
        %378 = vmatprep.subr.mxu0 0.0
        %379 = vmatpush1.msra.mxu0 %v352
        %380 = vmatprep.subr.mxu0 0.0
        %381 = vmatpush1.msra.mxu0 %v353
        %382 = vmatprep.subr.mxu0 0.0
        %383 = vmatpush1.msra.mxu0 %v354
        %384 = vmatprep.subr.mxu0 0.0
        %385 = vmatpush1.msra.mxu0 %v355
        %386 = vmatprep.subr.mxu0 0.0
        %387 = vmatpush1.msra.mxu0 %v356
        %388 = vmatprep.subr.mxu0 0.0
        %389 = vmatpush1.msra.mxu0 %v357
        %390 = vmatprep.subr.mxu0 0.0
        %391 = vmatpush1.msra.mxu0 %v358
        %392 = vmatprep.subr.mxu0 0.0
        %393 = vmatpush1.msra.mxu0 %v359
        %394 = vmatprep.subr.mxu0 0.0
        %395 = vmatpush1.msra.mxu0 %v360
        %396 = vmatprep.subr.mxu0 0.0
        %397 = vmatpush1.msra.mxu0 %v361
        %398 = vmatprep.subr.mxu0 0.0
        %399 = vmatpush1.msra.mxu0 %v362
        %400 = vmatprep.subr.mxu0 0.0
        %401 = vmatpush1.msra.mxu0 %v363
        %402 = vmatprep.subr.mxu0 0.0
        %403 = vmatpush1.msra.mxu0 %v364
        %404 = vmatprep.subr.mxu0 0.0
        %405 = vmatpush1.msra.mxu0 0.0
        %406 = vmatprep.subr.mxu0 0.0
        %407 = vmatpush1.msra.mxu0 0.0
        %408 = vmatprep.subr.mxu0 0.0
        %409 = vmatpush1.msra.mxu0 0.0
        %410 = vmatprep.subr.mxu0 0.0
        %411 = vmatpush1.msra.mxu0 0.0
        %412 = vmatprep.subr.mxu0 0.0
        %413 = vmatpush1.msra.mxu0 0.0
        %414 = vmatprep.subr.mxu0 0.0
        %415 = vmatpush1.msra.mxu0 0.0
        %416 = vmatprep.subr.mxu0 0.0
        %417 = vmatpush1.msra.mxu0 0.0
        %418 = vmatprep.subr.mxu0 0.0
        %419 = vmatpush1.msra.mxu0 0.0
        %420 = vmatprep.subr.mxu0 0.0
        %421 = vmatpush1.msra.mxu0 0.0
        %422 = vmatprep.subr.mxu0 0.0
        %423 = vmatpush1.msra.mxu0 0.0
        %424 = vmatprep.subr.mxu0 0.0
        %425 = vmatpush1.msra.mxu0 0.0
        %426 = vmatprep.subr.mxu0 0.0
        %427 = vmatpush1.msra.mxu0 0.0
        %428 = vmatprep.subr.mxu0 0.0
        %429 = vmatpush1.msra.mxu0 0.0
        %430 = vmatprep.subr.mxu0 0.0
        %431 = vmatpush1.msra.mxu0 0.0
        %432 = vmatprep.subr.mxu0 0.0
        %433 = vmatpush1.msra.mxu0 0.0
        %434 = vmatprep.subr.mxu0 0.0
        %435 = vmatpush1.msra.mxu0 0.0
        %436 = vmatprep.mubr.f32.mxu0 0.0
        %437 = vmatmul.mubr.f32.gmra.mrb[0].mxu0 %v341
        %v438 = vpop.f32.mrb[0].mxu0
        %v439 = vadd.f32 %v370, %v438
        %v440 = vpop.f32.mrb[0].mxu0
        %441 = vmatprep.mubr.f32.mxu0 0.0
        %442 = vmatmul.mubr.f32.gmra.mrb[0].mxu0 %v342
        %v443 = vpop.f32.mrb[0].mxu0
        %v444 = vadd.f32 %v370, %v443
        %v445 = vpop.f32.mrb[0].mxu0
        %446 = vmatprep.mubr.f32.mxu0 0.0
        %447 = vmatmul.mubr.f32.gmra.mrb[0].mxu0 %v343
        %v448 = vpop.f32.mrb[0].mxu0
        %v449 = vadd.f32 %v370, %v448
        %v450 = vpop.f32.mrb[0].mxu0
        %451 = vmatprep.mubr.f32.mxu0 0.0
        %452 = vmatmul.mubr.f32.gmra.mrb[0].mxu0 %v344
        %v453 = vpop.f32.mrb[0].mxu0
        %v454 = vadd.f32 %v370, %v453
        %v455 = vpop.f32.mrb[0].mxu0
        %456 = vmatprep.mubr.f32.mxu0 0.0
        %457 = vmatmul.mubr.f32.gmra.mrb[0].mxu0 %v345
        %v458 = vpop.f32.mrb[0].mxu0
        %v459 = vadd.f32 %v370, %v458
        %v460 = vpop.f32.mrb[0].mxu0
        %461 = vmatprep.mubr.f32.mxu0 0.0
        %462 = vmatmul.mubr.f32.gmra.mrb[0].mxu0 %v346
        %v463 = vpop.f32.mrb[0].mxu0
        %v464 = vadd.f32 %v370, %v463
        %v465 = vpop.f32.mrb[0].mxu0
        %466 = vmatprep.mubr.f32.mxu0 0.0
        %467 = vmatmul.mubr.f32.gmra.mrb[0].mxu0 %v347
        %v468 = vpop.f32.mrb[0].mxu0
        %v469 = vadd.f32 %v370, %v468
        %v470 = vpop.f32.mrb[0].mxu0
        %471 = vmatprep.mubr.f32.mxu0 0.0
        %472 = vmatmul.mubr.f32.gmra.mrb[0].mxu0 %v348
        %v473 = vpop.f32.mrb[0].mxu0
        %v474 = vadd.f32 %v370, %v473
        %v475 = vpop.f32.mrb[0].mxu0
        %476 = vdwg.mxu0
        %v477 = vmax.f32 %v439, 0.0
        %v478 = vmax.f32 %v444, 0.0
        %v479 = vmax.f32 %v449, 0.0
        %v480 = vmax.f32 %v454, 0.0
        %v481 = vmax.f32 %v459, 0.0
        %v482 = vmax.f32 %v464, 0.0
        %v483 = vmax.f32 %v469, 0.0
        %v484 = vmax.f32 %v474, 0.0
        %485 = vst [vmem:[#allocation2] sm:$0xff] 0.0
        %486 = vst [vmem:[#allocation2 + $0x8] sm:$0x3] 0.0
        %s487 = scalar_lea.vmem [#allocation2], 144
        %488 = vst [vmem:[%s487] sm:$0xff] 0.0
        %489 = vst [vmem:[%s487 + $0x8] sm:$0x3] 0.0
        %490 = vst [vmem:[#allocation2] sm:$0x1] 0.0
        %491 = vst [vmem:[#allocation2 + $0x10] sm:$0x1] 0.0
        %492 = vst [vmem:[#allocation2 + $0x20] sm:$0x1] 0.0
        %493 = vst [vmem:[#allocation2 + $0x30] sm:$0x1] 0.0
        %494 = vst [vmem:[#allocation2 + $0x40] sm:$0x1] 0.0
        %495 = vst [vmem:[#allocation2 + $0x50] sm:$0x1] 0.0
        %496 = vst [vmem:[#allocation2 + $0x60] sm:$0x1] 0.0
        %497 = vst [vmem:[#allocation2 + $0x70] sm:$0x1] 0.0
        %498 = vst [vmem:[#allocation2 + $0x80] sm:$0x1] 0.0
        %499 = vst [vmem:[#allocation2 + $0x90] sm:$0x1] 0.0
        %500 = vst [vmem:[#allocation2 + $0x9] sm:$0x1] 0.0
        %501 = vst [vmem:[#allocation2 + $0x19] sm:$0x1] 0.0
        %502 = vst [vmem:[#allocation2 + $0x29] sm:$0x1] 0.0
        %503 = vst [vmem:[#allocation2 + $0x39] sm:$0x1] 0.0
        %504 = vst [vmem:[#allocation2 + $0x49] sm:$0x1] 0.0
        %505 = vst [vmem:[#allocation2 + $0x59] sm:$0x1] 0.0
        %506 = vst [vmem:[#allocation2 + $0x69] sm:$0x1] 0.0
        %507 = vst [vmem:[#allocation2 + $0x79] sm:$0x1] 0.0
        %508 = vst [vmem:[#allocation2 + $0x89] sm:$0x1] 0.0
        %509 = vst [vmem:[#allocation2 + $0x99] sm:$0x1] 0.0
        %s510 = scalar_lea.vmem [#allocation2], 16
        %511 = vst [vmem:[%s510 + $0x1] sm:$0xff] %v477
        %512 = vst [vmem:[%s510 + $0x11] sm:$0xff] %v478
        %513 = vst [vmem:[%s510 + $0x21] sm:$0xff] %v479
        %514 = vst [vmem:[%s510 + $0x31] sm:$0xff] %v480
        %515 = vst [vmem:[%s510 + $0x41] sm:$0xff] %v481
        %516 = vst [vmem:[%s510 + $0x51] sm:$0xff] %v482
        %517 = vst [vmem:[%s510 + $0x61] sm:$0xff] %v483
        %518 = vst [vmem:[%s510 + $0x71] sm:$0xff] %v484
        %v519 = vld [vmem:[#allocation2] sm:$0xff]
        %v520 = vld [vmem:[#allocation2 + $0x10] sm:$0xff]
        %v521 = vld [vmem:[#allocation2 + $0x20] sm:$0xff]
        %v522 = vld [vmem:[#allocation2 + $0x30] sm:$0xff]
        %v523 = vld [vmem:[#allocation2 + $0x40] sm:$0xff]
        %v524 = vld [vmem:[#allocation2 + $0x50] sm:$0xff]
        %v525 = vld [vmem:[#allocation2 + $0x60] sm:$0xff]
        %v526 = vld [vmem:[#allocation2 + $0x70] sm:$0xff]
        %v527 = vld [vmem:[#allocation8] sm:$0xff]
        %v528 = vld [vmem:[#allocation8 + $0x8] sm:$0xff]
        %v529 = vld [vmem:[#allocation8 + $0x10] sm:$0xff]
        %v530 = vld [vmem:[#allocation8 + $0x18] sm:$0xff]
        %v531 = vld [vmem:[#allocation8 + $0x20] sm:$0xff]
        %v532 = vld [vmem:[#allocation8 + $0x28] sm:$0xff]
        %v533 = vld [vmem:[#allocation8 + $0x30] sm:$0xff]
        %v534 = vld [vmem:[#allocation8 + $0x38] sm:$0xff]
        %v535 = vld [vmem:[#allocation8 + $0x40] sm:$0xff]
        %v536 = vld [vmem:[#allocation8 + $0x48] sm:$0xff]
        %v537 = vld [vmem:[#allocation8 + $0x50] sm:$0xff]
        %v538 = vld [vmem:[#allocation8 + $0x58] sm:$0xff]
        %v539 = vld [vmem:[#allocation8 + $0x60] sm:$0xff]
        %v540 = vld [vmem:[#allocation8 + $0x68] sm:$0xff]
        %v541 = vld [vmem:[#allocation8 + $0x70] sm:$0xff]
        %v542 = vld [vmem:[#allocation8 + $0x78] sm:$0xff]
        %v543 = vld [vmem:[#allocation2 + $0x1] sm:$0xff]
        %v544 = vld [vmem:[#allocation2 + $0x11] sm:$0xff]
        %v545 = vld [vmem:[#allocation2 + $0x21] sm:$0xff]
        %v546 = vld [vmem:[#allocation2 + $0x31] sm:$0xff]
        %v547 = vld [vmem:[#allocation2 + $0x41] sm:$0xff]
        %v548 = vld [vmem:[#allocation2 + $0x51] sm:$0xff]
        %v549 = vld [vmem:[#allocation2 + $0x61] sm:$0xff]
        %v550 = vld [vmem:[#allocation2 + $0x71] sm:$0xff]
        %s551 = scalar_lea.vmem [#allocation8], 128
        %v552 = vld [vmem:[%s551] sm:$0xff]
        %v553 = vld [vmem:[%s551 + $0x8] sm:$0xff]
        %v554 = vld [vmem:[%s551 + $0x10] sm:$0xff]
        %v555 = vld [vmem:[%s551 + $0x18] sm:$0xff]
        %v556 = vld [vmem:[%s551 + $0x20] sm:$0xff]
        %v557 = vld [vmem:[%s551 + $0x28] sm:$0xff]
        %v558 = vld [vmem:[%s551 + $0x30] sm:$0xff]
        %v559 = vld [vmem:[%s551 + $0x38] sm:$0xff]
        %v560 = vld [vmem:[%s551 + $0x40] sm:$0xff]
        %v561 = vld [vmem:[%s551 + $0x48] sm:$0xff]
        %v562 = vld [vmem:[%s551 + $0x50] sm:$0xff]
        %v563 = vld [vmem:[%s551 + $0x58] sm:$0xff]
        %v564 = vld [vmem:[%s551 + $0x60] sm:$0xff]
        %v565 = vld [vmem:[%s551 + $0x68] sm:$0xff]
        %v566 = vld [vmem:[%s551 + $0x70] sm:$0xff]
        %v567 = vld [vmem:[%s551 + $0x78] sm:$0xff]
        %568 = vmatprep.subr.mxu0 0.0
        %569 = vmatpush1.msra.mxu0 %v552
        %570 = vmatprep.subr.mxu0 0.0
        %571 = vmatpush1.msra.mxu0 %v553
        %572 = vmatprep.subr.mxu0 0.0
        %573 = vmatpush1.msra.mxu0 %v554
        %574 = vmatprep.subr.mxu0 0.0
        %575 = vmatpush1.msra.mxu0 %v555
        %576 = vmatprep.subr.mxu0 0.0
        %577 = vmatpush1.msra.mxu0 %v556
        %578 = vmatprep.subr.mxu0 0.0
        %579 = vmatpush1.msra.mxu0 %v557
        %580 = vmatprep.subr.mxu0 0.0
        %581 = vmatpush1.msra.mxu0 %v558
        %582 = vmatprep.subr.mxu0 0.0
        %583 = vmatpush1.msra.mxu0 %v559
        %584 = vmatprep.subr.mxu0 0.0
        %585 = vmatpush1.msra.mxu0 %v560
        %586 = vmatprep.subr.mxu0 0.0
        %587 = vmatpush1.msra.mxu0 %v561
        %588 = vmatprep.subr.mxu0 0.0
        %589 = vmatpush1.msra.mxu0 %v562
        %590 = vmatprep.subr.mxu0 0.0
        %591 = vmatpush1.msra.mxu0 %v563
        %592 = vmatprep.subr.mxu0 0.0
        %593 = vmatpush1.msra.mxu0 %v564
        %594 = vmatprep.subr.mxu0 0.0
        %595 = vmatpush1.msra.mxu0 %v565
        %596 = vmatprep.subr.mxu0 0.0
        %597 = vmatpush1.msra.mxu0 %v566
        %598 = vmatprep.subr.mxu0 0.0
        %599 = vmatpush1.msra.mxu0 %v567
        %600 = vmatprep.subr.mxu0 0.0
        %601 = vmatpush1.msra.mxu0 0.0
        %602 = vmatprep.subr.mxu0 0.0
        %603 = vmatpush1.msra.mxu0 0.0
        %604 = vmatprep.subr.mxu0 0.0
        %605 = vmatpush1.msra.mxu0 0.0
        %606 = vmatprep.subr.mxu0 0.0
        %607 = vmatpush1.msra.mxu0 0.0
        %608 = vmatprep.subr.mxu0 0.0
        %609 = vmatpush1.msra.mxu0 0.0
        %610 = vmatprep.subr.mxu0 0.0
        %611 = vmatpush1.msra.mxu0 0.0
        %612 = vmatprep.subr.mxu0 0.0
        %613 = vmatpush1.msra.mxu0 0.0
        %614 = vmatprep.subr.mxu0 0.0
        %615 = vmatpush1.msra.mxu0 0.0
        %616 = vmatprep.subr.mxu0 0.0
        %617 = vmatpush1.msra.mxu0 0.0
        %618 = vmatprep.subr.mxu0 0.0
        %619 = vmatpush1.msra.mxu0 0.0
        %620 = vmatprep.subr.mxu0 0.0
        %621 = vmatpush1.msra.mxu0 0.0
        %622 = vmatprep.subr.mxu0 0.0
        %623 = vmatpush1.msra.mxu0 0.0
        %624 = vmatprep.subr.mxu0 0.0
        %625 = vmatpush1.msra.mxu0 0.0
        %626 = vmatprep.subr.mxu0 0.0
        %627 = vmatpush1.msra.mxu0 0.0
        %628 = vmatprep.subr.mxu0 0.0
        %629 = vmatpush1.msra.mxu0 0.0
        %630 = vmatprep.subr.mxu0 0.0
        %631 = vmatpush1.msra.mxu0 0.0
        %632 = vmatprep.mubr.f32.mxu0 0.0
        %633 = vmatmul.mubr.f32.gmra.mrb[0].mxu0 %v543
        %v634 = vpop.f32.mrb[0].mxu0
        %v635 = vadd.f32 0.0, %v634
        %v636 = vpop.f32.mrb[0].mxu0
        %637 = vmatprep.mubr.f32.mxu0 0.0
        %638 = vmatmul.mubr.f32.gmra.mrb[0].mxu0 %v544
        %v639 = vpop.f32.mrb[0].mxu0
        %v640 = vadd.f32 0.0, %v639
        %v641 = vpop.f32.mrb[0].mxu0
        %642 = vmatprep.mubr.f32.mxu0 0.0
        %643 = vmatmul.mubr.f32.gmra.mrb[0].mxu0 %v545
        %v644 = vpop.f32.mrb[0].mxu0
        %v645 = vadd.f32 0.0, %v644
        %v646 = vpop.f32.mrb[0].mxu0
        %647 = vmatprep.mubr.f32.mxu0 0.0
        %648 = vmatmul.mubr.f32.gmra.mrb[0].mxu0 %v546
        %v649 = vpop.f32.mrb[0].mxu0
        %v650 = vadd.f32 0.0, %v649
        %v651 = vpop.f32.mrb[0].mxu0
        %652 = vmatprep.mubr.f32.mxu0 0.0
        %653 = vmatmul.mubr.f32.gmra.mrb[0].mxu0 %v547
        %v654 = vpop.f32.mrb[0].mxu0
        %v655 = vadd.f32 0.0, %v654
        %v656 = vpop.f32.mrb[0].mxu0
        %657 = vmatprep.mubr.f32.mxu0 0.0
        %658 = vmatmul.mubr.f32.gmra.mrb[0].mxu0 %v548
        %v659 = vpop.f32.mrb[0].mxu0
        %v660 = vadd.f32 0.0, %v659
        %v661 = vpop.f32.mrb[0].mxu0
        %662 = vmatprep.mubr.f32.mxu0 0.0
        %663 = vmatmul.mubr.f32.gmra.mrb[0].mxu0 %v549
        %v664 = vpop.f32.mrb[0].mxu0
        %v665 = vadd.f32 0.0, %v664
        %v666 = vpop.f32.mrb[0].mxu0
        %667 = vmatprep.mubr.f32.mxu0 0.0
        %668 = vmatmul.mubr.f32.gmra.mrb[0].mxu0 %v550
        %v669 = vpop.f32.mrb[0].mxu0
        %v670 = vadd.f32 0.0, %v669
        %v671 = vpop.f32.mrb[0].mxu0
        %672 = vdwg.mxu0
        %673 = vmatprep.subr.mxu0 0.0
        %674 = vmatpush1.msra.mxu0 %v527
        %675 = vmatprep.subr.mxu0 0.0
        %676 = vmatpush1.msra.mxu0 %v528
        %677 = vmatprep.subr.mxu0 0.0
        %678 = vmatpush1.msra.mxu0 %v529
        %679 = vmatprep.subr.mxu0 0.0
        %680 = vmatpush1.msra.mxu0 %v530
        %681 = vmatprep.subr.mxu0 0.0
        %682 = vmatpush1.msra.mxu0 %v531
        %683 = vmatprep.subr.mxu0 0.0
        %684 = vmatpush1.msra.mxu0 %v532
        %685 = vmatprep.subr.mxu0 0.0
        %686 = vmatpush1.msra.mxu0 %v533
        %687 = vmatprep.subr.mxu0 0.0
        %688 = vmatpush1.msra.mxu0 %v534
        %689 = vmatprep.subr.mxu0 0.0
        %690 = vmatpush1.msra.mxu0 %v535
        %691 = vmatprep.subr.mxu0 0.0
        %692 = vmatpush1.msra.mxu0 %v536
        %693 = vmatprep.subr.mxu0 0.0
        %694 = vmatpush1.msra.mxu0 %v537
        %695 = vmatprep.subr.mxu0 0.0
        %696 = vmatpush1.msra.mxu0 %v538
        %697 = vmatprep.subr.mxu0 0.0
        %698 = vmatpush1.msra.mxu0 %v539
        %699 = vmatprep.subr.mxu0 0.0
        %700 = vmatpush1.msra.mxu0 %v540
        %701 = vmatprep.subr.mxu0 0.0
        %702 = vmatpush1.msra.mxu0 %v541
        %703 = vmatprep.subr.mxu0 0.0
        %704 = vmatpush1.msra.mxu0 %v542
        %705 = vmatprep.subr.mxu0 0.0
        %706 = vmatpush1.msra.mxu0 0.0
        %707 = vmatprep.subr.mxu0 0.0
        %708 = vmatpush1.msra.mxu0 0.0
        %709 = vmatprep.subr.mxu0 0.0
        %710 = vmatpush1.msra.mxu0 0.0
        %711 = vmatprep.subr.mxu0 0.0
        %712 = vmatpush1.msra.mxu0 0.0
        %713 = vmatprep.subr.mxu0 0.0
        %714 = vmatpush1.msra.mxu0 0.0
        %715 = vmatprep.subr.mxu0 0.0
        %716 = vmatpush1.msra.mxu0 0.0
        %717 = vmatprep.subr.mxu0 0.0
        %718 = vmatpush1.msra.mxu0 0.0
        %719 = vmatprep.subr.mxu0 0.0
        %720 = vmatpush1.msra.mxu0 0.0
        %721 = vmatprep.subr.mxu0 0.0
        %722 = vmatpush1.msra.mxu0 0.0
        %723 = vmatprep.subr.mxu0 0.0
        %724 = vmatpush1.msra.mxu0 0.0
        %725 = vmatprep.subr.mxu0 0.0
        %726 = vmatpush1.msra.mxu0 0.0
        %727 = vmatprep.subr.mxu0 0.0
        %728 = vmatpush1.msra.mxu0 0.0
        %729 = vmatprep.subr.mxu0 0.0
        %730 = vmatpush1.msra.mxu0 0.0
        %731 = vmatprep.subr.mxu0 0.0
        %732 = vmatpush1.msra.mxu0 0.0
        %733 = vmatprep.subr.mxu0 0.0
        %734 = vmatpush1.msra.mxu0 0.0
        %735 = vmatprep.subr.mxu0 0.0
        %736 = vmatpush1.msra.mxu0 0.0
        %737 = vmatprep.mubr.f32.mxu0 0.0
        %738 = vmatmul.mubr.f32.gmra.mrb[0].mxu0 %v519
        %v739 = vpop.f32.mrb[0].mxu0
        %v740 = vadd.f32 %v635, %v739
        %v741 = vpop.f32.mrb[0].mxu0
        %742 = vmatprep.mubr.f32.mxu0 0.0
        %743 = vmatmul.mubr.f32.gmra.mrb[0].mxu0 %v520
        %v744 = vpop.f32.mrb[0].mxu0
        %v745 = vadd.f32 %v640, %v744
        %v746 = vpop.f32.mrb[0].mxu0
        %747 = vmatprep.mubr.f32.mxu0 0.0
        %748 = vmatmul.mubr.f32.gmra.mrb[0].mxu0 %v521
        %v749 = vpop.f32.mrb[0].mxu0
        %v750 = vadd.f32 %v645, %v749
        %v751 = vpop.f32.mrb[0].mxu0
        %752 = vmatprep.mubr.f32.mxu0 0.0
        %753 = vmatmul.mubr.f32.gmra.mrb[0].mxu0 %v522
        %v754 = vpop.f32.mrb[0].mxu0
        %v755 = vadd.f32 %v650, %v754
        %v756 = vpop.f32.mrb[0].mxu0
        %757 = vmatprep.mubr.f32.mxu0 0.0
        %758 = vmatmul.mubr.f32.gmra.mrb[0].mxu0 %v523
        %v759 = vpop.f32.mrb[0].mxu0
        %v760 = vadd.f32 %v655, %v759
        %v761 = vpop.f32.mrb[0].mxu0
        %762 = vmatprep.mubr.f32.mxu0 0.0
        %763 = vmatmul.mubr.f32.gmra.mrb[0].mxu0 %v524
        %v764 = vpop.f32.mrb[0].mxu0
        %v765 = vadd.f32 %v660, %v764
        %v766 = vpop.f32.mrb[0].mxu0
        %767 = vmatprep.mubr.f32.mxu0 0.0
        %768 = vmatmul.mubr.f32.gmra.mrb[0].mxu0 %v525
        %v769 = vpop.f32.mrb[0].mxu0
        %v770 = vadd.f32 %v665, %v769
        %v771 = vpop.f32.mrb[0].mxu0
        %772 = vmatprep.mubr.f32.mxu0 0.0
        %773 = vmatmul.mubr.f32.gmra.mrb[0].mxu0 %v526
        %v774 = vpop.f32.mrb[0].mxu0
        %v775 = vadd.f32 %v670, %v774
        %v776 = vpop.f32.mrb[0].mxu0
        %777 = vdwg.mxu0
        %v778 = vld [vmem:[#allocation2 + $0x2] sm:$0xff]
        %v779 = vld [vmem:[#allocation2 + $0x12] sm:$0xff]
        %v780 = vld [vmem:[#allocation2 + $0x22] sm:$0xff]
        %v781 = vld [vmem:[#allocation2 + $0x32] sm:$0xff]
        %v782 = vld [vmem:[#allocation2 + $0x42] sm:$0xff]
        %v783 = vld [vmem:[#allocation2 + $0x52] sm:$0xff]
        %v784 = vld [vmem:[#allocation2 + $0x62] sm:$0xff]
        %v785 = vld [vmem:[#allocation2 + $0x72] sm:$0xff]
        %s786 = scalar_lea.vmem [#allocation8], 256
        %v787 = vld [vmem:[%s786] sm:$0xff]
        %v788 = vld [vmem:[%s786 + $0x8] sm:$0xff]
        %v789 = vld [vmem:[%s786 + $0x10] sm:$0xff]
        %v790 = vld [vmem:[%s786 + $0x18] sm:$0xff]
        %v791 = vld [vmem:[%s786 + $0x20] sm:$0xff]
        %v792 = vld [vmem:[%s786 + $0x28] sm:$0xff]
        %v793 = vld [vmem:[%s786 + $0x30] sm:$0xff]
        %v794 = vld [vmem:[%s786 + $0x38] sm:$0xff]
        %v795 = vld [vmem:[%s786 + $0x40] sm:$0xff]
        %v796 = vld [vmem:[%s786 + $0x48] sm:$0xff]
        %v797 = vld [vmem:[%s786 + $0x50] sm:$0xff]
        %v798 = vld [vmem:[%s786 + $0x58] sm:$0xff]
        %v799 = vld [vmem:[%s786 + $0x60] sm:$0xff]
        %v800 = vld [vmem:[%s786 + $0x68] sm:$0xff]
        %v801 = vld [vmem:[%s786 + $0x70] sm:$0xff]
        %v802 = vld [vmem:[%s786 + $0x78] sm:$0xff]
        %803 = vmatprep.subr.mxu0 0.0
        %804 = vmatpush1.msra.mxu0 %v787
        %805 = vmatprep.subr.mxu0 0.0
        %806 = vmatpush1.msra.mxu0 %v788
        %807 = vmatprep.subr.mxu0 0.0
        %808 = vmatpush1.msra.mxu0 %v789
        %809 = vmatprep.subr.mxu0 0.0
        %810 = vmatpush1.msra.mxu0 %v790
        %811 = vmatprep.subr.mxu0 0.0
        %812 = vmatpush1.msra.mxu0 %v791
        %813 = vmatprep.subr.mxu0 0.0
        %814 = vmatpush1.msra.mxu0 %v792
        %815 = vmatprep.subr.mxu0 0.0
        %816 = vmatpush1.msra.mxu0 %v793
        %817 = vmatprep.subr.mxu0 0.0
        %818 = vmatpush1.msra.mxu0 %v794
        %819 = vmatprep.subr.mxu0 0.0
        %820 = vmatpush1.msra.mxu0 %v795
        %821 = vmatprep.subr.mxu0 0.0
        %822 = vmatpush1.msra.mxu0 %v796
        %823 = vmatprep.subr.mxu0 0.0
        %824 = vmatpush1.msra.mxu0 %v797
        %825 = vmatprep.subr.mxu0 0.0
        %826 = vmatpush1.msra.mxu0 %v798
        %827 = vmatprep.subr.mxu0 0.0
        %828 = vmatpush1.msra.mxu0 %v799
        %829 = vmatprep.subr.mxu0 0.0
        %830 = vmatpush1.msra.mxu0 %v800
        %831 = vmatprep.subr.mxu0 0.0
        %832 = vmatpush1.msra.mxu0 %v801
        %833 = vmatprep.subr.mxu0 0.0
        %834 = vmatpush1.msra.mxu0 %v802
        %835 = vmatprep.subr.mxu0 0.0
        %836 = vmatpush1.msra.mxu0 0.0
        %837 = vmatprep.subr.mxu0 0.0
        %838 = vmatpush1.msra.mxu0 0.0
        %839 = vmatprep.subr.mxu0 0.0
        %840 = vmatpush1.msra.mxu0 0.0
        %841 = vmatprep.subr.mxu0 0.0
        %842 = vmatpush1.msra.mxu0 0.0
        %843 = vmatprep.subr.mxu0 0.0
        %844 = vmatpush1.msra.mxu0 0.0
        %845 = vmatprep.subr.mxu0 0.0
        %846 = vmatpush1.msra.mxu0 0.0
        %847 = vmatprep.subr.mxu0 0.0
        %848 = vmatpush1.msra.mxu0 0.0
        %849 = vmatprep.subr.mxu0 0.0
        %850 = vmatpush1.msra.mxu0 0.0
        %851 = vmatprep.subr.mxu0 0.0
        %852 = vmatpush1.msra.mxu0 0.0
        %853 = vmatprep.subr.mxu0 0.0
        %854 = vmatpush1.msra.mxu0 0.0
        %855 = vmatprep.subr.mxu0 0.0
        %856 = vmatpush1.msra.mxu0 0.0
        %857 = vmatprep.subr.mxu0 0.0
        %858 = vmatpush1.msra.mxu0 0.0
        %859 = vmatprep.subr.mxu0 0.0
        %860 = vmatpush1.msra.mxu0 0.0
        %861 = vmatprep.subr.mxu0 0.0
        %862 = vmatpush1.msra.mxu0 0.0
        %863 = vmatprep.subr.mxu0 0.0
        %864 = vmatpush1.msra.mxu0 0.0
        %865 = vmatprep.subr.mxu0 0.0
        %866 = vmatpush1.msra.mxu0 0.0
        %867 = vmatprep.mubr.f32.mxu0 0.0
        %868 = vmatmul.mubr.f32.gmra.mrb[0].mxu0 %v778
        %v869 = vpop.f32.mrb[0].mxu0
        %v870 = vadd.f32 0.0, %v869
        %v871 = vpop.f32.mrb[0].mxu0
        %872 = vmatprep.mubr.f32.mxu0 0.0
        %873 = vmatmul.mubr.f32.gmra.mrb[0].mxu0 %v779
        %v874 = vpop.f32.mrb[0].mxu0
        %v875 = vadd.f32 0.0, %v874
        %v876 = vpop.f32.mrb[0].mxu0
        %877 = vmatprep.mubr.f32.mxu0 0.0
        %878 = vmatmul.mubr.f32.gmra.mrb[0].mxu0 %v780
        %v879 = vpop.f32.mrb[0].mxu0
        %v880 = vadd.f32 0.0, %v879
        %v881 = vpop.f32.mrb[0].mxu0
        %882 = vmatprep.mubr.f32.mxu0 0.0
        %883 = vmatmul.mubr.f32.gmra.mrb[0].mxu0 %v781
        %v884 = vpop.f32.mrb[0].mxu0
        %v885 = vadd.f32 0.0, %v884
        %v886 = vpop.f32.mrb[0].mxu0
        %887 = vmatprep.mubr.f32.mxu0 0.0
        %888 = vmatmul.mubr.f32.gmra.mrb[0].mxu0 %v782
        %v889 = vpop.f32.mrb[0].mxu0
        %v890 = vadd.f32 0.0, %v889
        %v891 = vpop.f32.mrb[0].mxu0
        %892 = vmatprep.mubr.f32.mxu0 0.0
        %893 = vmatmul.mubr.f32.gmra.mrb[0].mxu0 %v783
        %v894 = vpop.f32.mrb[0].mxu0
        %v895 = vadd.f32 0.0, %v894
        %v896 = vpop.f32.mrb[0].mxu0
        %897 = vmatprep.mubr.f32.mxu0 0.0
        %898 = vmatmul.mubr.f32.gmra.mrb[0].mxu0 %v784
        %v899 = vpop.f32.mrb[0].mxu0
        %v900 = vadd.f32 0.0, %v899
        %v901 = vpop.f32.mrb[0].mxu0
        %902 = vmatprep.mubr.f32.mxu0 0.0
        %903 = vmatmul.mubr.f32.gmra.mrb[0].mxu0 %v785
        %v904 = vpop.f32.mrb[0].mxu0
        %v905 = vadd.f32 0.0, %v904
        %v906 = vpop.f32.mrb[0].mxu0
        %907 = vdwg.mxu0
        %v908 = vadd.f32 %v740, %v870
        %v909 = vadd.f32 %v745, %v875
        %v910 = vadd.f32 %v750, %v880
        %v911 = vadd.f32 %v755, %v885
        %v912 = vadd.f32 %v760, %v890
        %v913 = vadd.f32 %v765, %v895
        %v914 = vadd.f32 %v770, %v900
        %v915 = vadd.f32 %v775, %v905
        %v916 = vld [vmem:[%s510] sm:$0xff]
        %v917 = vld [vmem:[%s510 + $0x10] sm:$0xff]
        %v918 = vld [vmem:[%s510 + $0x20] sm:$0xff]
        %v919 = vld [vmem:[%s510 + $0x30] sm:$0xff]
        %v920 = vld [vmem:[%s510 + $0x40] sm:$0xff]
        %v921 = vld [vmem:[%s510 + $0x50] sm:$0xff]
        %v922 = vld [vmem:[%s510 + $0x60] sm:$0xff]
        %v923 = vld [vmem:[%s510 + $0x70] sm:$0xff]
        %s924 = scalar_lea.vmem [#allocation8], 384
        %v925 = vld [vmem:[%s924] sm:$0xff]
        %v926 = vld [vmem:[%s924 + $0x8] sm:$0xff]
        %v927 = vld [vmem:[%s924 + $0x10] sm:$0xff]
        %v928 = vld [vmem:[%s924 + $0x18] sm:$0xff]
        %v929 = vld [vmem:[%s924 + $0x20] sm:$0xff]
        %v930 = vld [vmem:[%s924 + $0x28] sm:$0xff]
        %v931 = vld [vmem:[%s924 + $0x30] sm:$0xff]
        %v932 = vld [vmem:[%s924 + $0x38] sm:$0xff]
        %v933 = vld [vmem:[%s924 + $0x40] sm:$0xff]
        %v934 = vld [vmem:[%s924 + $0x48] sm:$0xff]
        %v935 = vld [vmem:[%s924 + $0x50] sm:$0xff]
        %v936 = vld [vmem:[%s924 + $0x58] sm:$0xff]
        %v937 = vld [vmem:[%s924 + $0x60] sm:$0xff]
        %v938 = vld [vmem:[%s924 + $0x68] sm:$0xff]
        %v939 = vld [vmem:[%s924 + $0x70] sm:$0xff]
        %v940 = vld [vmem:[%s924 + $0x78] sm:$0xff]
        %941 = vmatprep.subr.mxu0 0.0
        %942 = vmatpush1.msra.mxu0 %v925
        %943 = vmatprep.subr.mxu0 0.0
        %944 = vmatpush1.msra.mxu0 %v926
        %945 = vmatprep.subr.mxu0 0.0
        %946 = vmatpush1.msra.mxu0 %v927
        %947 = vmatprep.subr.mxu0 0.0
        %948 = vmatpush1.msra.mxu0 %v928
        %949 = vmatprep.subr.mxu0 0.0
        %950 = vmatpush1.msra.mxu0 %v929
        %951 = vmatprep.subr.mxu0 0.0
        %952 = vmatpush1.msra.mxu0 %v930
        %953 = vmatprep.subr.mxu0 0.0
        %954 = vmatpush1.msra.mxu0 %v931
        %955 = vmatprep.subr.mxu0 0.0
        %956 = vmatpush1.msra.mxu0 %v932
        %957 = vmatprep.subr.mxu0 0.0
        %958 = vmatpush1.msra.mxu0 %v933
        %959 = vmatprep.subr.mxu0 0.0
        %960 = vmatpush1.msra.mxu0 %v934
        %961 = vmatprep.subr.mxu0 0.0
        %962 = vmatpush1.msra.mxu0 %v935
        %963 = vmatprep.subr.mxu0 0.0
        %964 = vmatpush1.msra.mxu0 %v936
        %965 = vmatprep.subr.mxu0 0.0
        %966 = vmatpush1.msra.mxu0 %v937
        %967 = vmatprep.subr.mxu0 0.0
        %968 = vmatpush1.msra.mxu0 %v938
        %969 = vmatprep.subr.mxu0 0.0
        %970 = vmatpush1.msra.mxu0 %v939
        %971 = vmatprep.subr.mxu0 0.0
        %972 = vmatpush1.msra.mxu0 %v940
        %973 = vmatprep.subr.mxu0 0.0
        %974 = vmatpush1.msra.mxu0 0.0
        %975 = vmatprep.subr.mxu0 0.0
        %976 = vmatpush1.msra.mxu0 0.0
        %977 = vmatprep.subr.mxu0 0.0
        %978 = vmatpush1.msra.mxu0 0.0
        %979 = vmatprep.subr.mxu0 0.0
        %980 = vmatpush1.msra.mxu0 0.0
        %981 = vmatprep.subr.mxu0 0.0
        %982 = vmatpush1.msra.mxu0 0.0
        %983 = vmatprep.subr.mxu0 0.0
        %984 = vmatpush1.msra.mxu0 0.0
        %985 = vmatprep.subr.mxu0 0.0
        %986 = vmatpush1.msra.mxu0 0.0
        %987 = vmatprep.subr.mxu0 0.0
        %988 = vmatpush1.msra.mxu0 0.0
        %989 = vmatprep.subr.mxu0 0.0
        %990 = vmatpush1.msra.mxu0 0.0
        %991 = vmatprep.subr.mxu0 0.0
        %992 = vmatpush1.msra.mxu0 0.0
        %993 = vmatprep.subr.mxu0 0.0
        %994 = vmatpush1.msra.mxu0 0.0
        %995 = vmatprep.subr.mxu0 0.0
        %996 = vmatpush1.msra.mxu0 0.0
        %997 = vmatprep.subr.mxu0 0.0
        %998 = vmatpush1.msra.mxu0 0.0
        %999 = vmatprep.subr.mxu0 0.0
        %1000 = vmatpush1.msra.mxu0 0.0
        %1001 = vmatprep.subr.mxu0 0.0
        %1002 = vmatpush1.msra.mxu0 0.0
        %1003 = vmatprep.subr.mxu0 0.0
        %1004 = vmatpush1.msra.mxu0 0.0
        %1005 = vmatprep.mubr.f32.mxu0 0.0
        %1006 = vmatmul.mubr.f32.gmra.mrb[0].mxu0 %v916
        %v1007 = vpop.f32.mrb[0].mxu0
        %v1008 = vadd.f32 0.0, %v1007
        %v1009 = vpop.f32.mrb[0].mxu0
        %1010 = vmatprep.mubr.f32.mxu0 0.0
        %1011 = vmatmul.mubr.f32.gmra.mrb[0].mxu0 %v917
        %v1012 = vpop.f32.mrb[0].mxu0
        %v1013 = vadd.f32 0.0, %v1012
        %v1014 = vpop.f32.mrb[0].mxu0
        %1015 = vmatprep.mubr.f32.mxu0 0.0
        %1016 = vmatmul.mubr.f32.gmra.mrb[0].mxu0 %v918
        %v1017 = vpop.f32.mrb[0].mxu0
        %v1018 = vadd.f32 0.0, %v1017
        %v1019 = vpop.f32.mrb[0].mxu0
        %1020 = vmatprep.mubr.f32.mxu0 0.0
        %1021 = vmatmul.mubr.f32.gmra.mrb[0].mxu0 %v919
        %v1022 = vpop.f32.mrb[0].mxu0
        %v1023 = vadd.f32 0.0, %v1022
        %v1024 = vpop.f32.mrb[0].mxu0
        %1025 = vmatprep.mubr.f32.mxu0 0.0
        %1026 = vmatmul.mubr.f32.gmra.mrb[0].mxu0 %v920
        %v1027 = vpop.f32.mrb[0].mxu0
        %v1028 = vadd.f32 0.0, %v1027
        %v1029 = vpop.f32.mrb[0].mxu0
        %1030 = vmatprep.mubr.f32.mxu0 0.0
        %1031 = vmatmul.mubr.f32.gmra.mrb[0].mxu0 %v921
        %v1032 = vpop.f32.mrb[0].mxu0
        %v1033 = vadd.f32 0.0, %v1032
        %v1034 = vpop.f32.mrb[0].mxu0
        %1035 = vmatprep.mubr.f32.mxu0 0.0
        %1036 = vmatmul.mubr.f32.gmra.mrb[0].mxu0 %v922
        %v1037 = vpop.f32.mrb[0].mxu0
        %v1038 = vadd.f32 0.0, %v1037
        %v1039 = vpop.f32.mrb[0].mxu0
        %1040 = vmatprep.mubr.f32.mxu0 0.0
        %1041 = vmatmul.mubr.f32.gmra.mrb[0].mxu0 %v923
        %v1042 = vpop.f32.mrb[0].mxu0
        %v1043 = vadd.f32 0.0, %v1042
        %v1044 = vpop.f32.mrb[0].mxu0
        %1045 = vdwg.mxu0
        %v1046 = vadd.f32 %v908, %v1008
        %v1047 = vadd.f32 %v909, %v1013
        %v1048 = vadd.f32 %v910, %v1018
        %v1049 = vadd.f32 %v911, %v1023
        %v1050 = vadd.f32 %v912, %v1028
        %v1051 = vadd.f32 %v913, %v1033
        %v1052 = vadd.f32 %v914, %v1038
        %v1053 = vadd.f32 %v915, %v1043
        %v1054 = vld [vmem:[%s510 + $0x1] sm:$0xff]
        %v1055 = vld [vmem:[%s510 + $0x11] sm:$0xff]
        %v1056 = vld [vmem:[%s510 + $0x21] sm:$0xff]
        %v1057 = vld [vmem:[%s510 + $0x31] sm:$0xff]
        %v1058 = vld [vmem:[%s510 + $0x41] sm:$0xff]
        %v1059 = vld [vmem:[%s510 + $0x51] sm:$0xff]
        %v1060 = vld [vmem:[%s510 + $0x61] sm:$0xff]
        %v1061 = vld [vmem:[%s510 + $0x71] sm:$0xff]
        %s1062 = scalar_lea.vmem [#allocation8], 512
        %v1063 = vld [vmem:[%s1062] sm:$0xff]
        %v1064 = vld [vmem:[%s1062 + $0x8] sm:$0xff]
        %v1065 = vld [vmem:[%s1062 + $0x10] sm:$0xff]
        %v1066 = vld [vmem:[%s1062 + $0x18] sm:$0xff]
        %v1067 = vld [vmem:[%s1062 + $0x20] sm:$0xff]
        %v1068 = vld [vmem:[%s1062 + $0x28] sm:$0xff]
        %v1069 = vld [vmem:[%s1062 + $0x30] sm:$0xff]
        %v1070 = vld [vmem:[%s1062 + $0x38] sm:$0xff]
        %v1071 = vld [vmem:[%s1062 + $0x40] sm:$0xff]
        %v1072 = vld [vmem:[%s1062 + $0x48] sm:$0xff]
        %v1073 = vld [vmem:[%s1062 + $0x50] sm:$0xff]
        %v1074 = vld [vmem:[%s1062 + $0x58] sm:$0xff]
        %v1075 = vld [vmem:[%s1062 + $0x60] sm:$0xff]
        %v1076 = vld [vmem:[%s1062 + $0x68] sm:$0xff]
        %v1077 = vld [vmem:[%s1062 + $0x70] sm:$0xff]
        %v1078 = vld [vmem:[%s1062 + $0x78] sm:$0xff]
        %1079 = vmatprep.subr.mxu0 0.0
        %1080 = vmatpush1.msra.mxu0 %v1063
        %1081 = vmatprep.subr.mxu0 0.0
        %1082 = vmatpush1.msra.mxu0 %v1064
        %1083 = vmatprep.subr.mxu0 0.0
        %1084 = vmatpush1.msra.mxu0 %v1065
        %1085 = vmatprep.subr.mxu0 0.0
        %1086 = vmatpush1.msra.mxu0 %v1066
        %1087 = vmatprep.subr.mxu0 0.0
        %1088 = vmatpush1.msra.mxu0 %v1067
        %1089 = vmatprep.subr.mxu0 0.0
        %1090 = vmatpush1.msra.mxu0 %v1068
        %1091 = vmatprep.subr.mxu0 0.0
        %1092 = vmatpush1.msra.mxu0 %v1069
        %1093 = vmatprep.subr.mxu0 0.0
        %1094 = vmatpush1.msra.mxu0 %v1070
        %1095 = vmatprep.subr.mxu0 0.0
        %1096 = vmatpush1.msra.mxu0 %v1071
        %1097 = vmatprep.subr.mxu0 0.0
        %1098 = vmatpush1.msra.mxu0 %v1072
        %1099 = vmatprep.subr.mxu0 0.0
        %1100 = vmatpush1.msra.mxu0 %v1073
        %1101 = vmatprep.subr.mxu0 0.0
        %1102 = vmatpush1.msra.mxu0 %v1074
        %1103 = vmatprep.subr.mxu0 0.0
        %1104 = vmatpush1.msra.mxu0 %v1075
        %1105 = vmatprep.subr.mxu0 0.0
        %1106 = vmatpush1.msra.mxu0 %v1076
        %1107 = vmatprep.subr.mxu0 0.0
        %1108 = vmatpush1.msra.mxu0 %v1077
        %1109 = vmatprep.subr.mxu0 0.0
        %1110 = vmatpush1.msra.mxu0 %v1078
        %1111 = vmatprep.subr.mxu0 0.0
        %1112 = vmatpush1.msra.mxu0 0.0
        %1113 = vmatprep.subr.mxu0 0.0
        %1114 = vmatpush1.msra.mxu0 0.0
        %1115 = vmatprep.subr.mxu0 0.0
        %1116 = vmatpush1.msra.mxu0 0.0
        %1117 = vmatprep.subr.mxu0 0.0
        %1118 = vmatpush1.msra.mxu0 0.0
        %1119 = vmatprep.subr.mxu0 0.0
        %1120 = vmatpush1.msra.mxu0 0.0
        %1121 = vmatprep.subr.mxu0 0.0
        %1122 = vmatpush1.msra.mxu0 0.0
        %1123 = vmatprep.subr.mxu0 0.0
        %1124 = vmatpush1.msra.mxu0 0.0
        %1125 = vmatprep.subr.mxu0 0.0
        %1126 = vmatpush1.msra.mxu0 0.0
        %1127 = vmatprep.subr.mxu0 0.0
        %1128 = vmatpush1.msra.mxu0 0.0
        %1129 = vmatprep.subr.mxu0 0.0
        %1130 = vmatpush1.msra.mxu0 0.0
        %1131 = vmatprep.subr.mxu0 0.0
        %1132 = vmatpush1.msra.mxu0 0.0
        %1133 = vmatprep.subr.mxu0 0.0
        %1134 = vmatpush1.msra.mxu0 0.0
        %1135 = vmatprep.subr.mxu0 0.0
        %1136 = vmatpush1.msra.mxu0 0.0
        %1137 = vmatprep.subr.mxu0 0.0
        %1138 = vmatpush1.msra.mxu0 0.0
        %1139 = vmatprep.subr.mxu0 0.0
        %1140 = vmatpush1.msra.mxu0 0.0
        %1141 = vmatprep.subr.mxu0 0.0
        %1142 = vmatpush1.msra.mxu0 0.0
        %1143 = vmatprep.mubr.f32.mxu0 0.0
        %1144 = vmatmul.mubr.f32.gmra.mrb[0].mxu0 %v1054
        %v1145 = vpop.f32.mrb[0].mxu0
        %v1146 = vadd.f32 0.0, %v1145
        %v1147 = vpop.f32.mrb[0].mxu0
        %1148 = vmatprep.mubr.f32.mxu0 0.0
        %1149 = vmatmul.mubr.f32.gmra.mrb[0].mxu0 %v1055
        %v1150 = vpop.f32.mrb[0].mxu0
        %v1151 = vadd.f32 0.0, %v1150
        %v1152 = vpop.f32.mrb[0].mxu0
        %1153 = vmatprep.mubr.f32.mxu0 0.0
        %1154 = vmatmul.mubr.f32.gmra.mrb[0].mxu0 %v1056
        %v1155 = vpop.f32.mrb[0].mxu0
        %v1156 = vadd.f32 0.0, %v1155
        %v1157 = vpop.f32.mrb[0].mxu0
        %1158 = vmatprep.mubr.f32.mxu0 0.0
        %1159 = vmatmul.mubr.f32.gmra.mrb[0].mxu0 %v1057
        %v1160 = vpop.f32.mrb[0].mxu0
        %v1161 = vadd.f32 0.0, %v1160
        %v1162 = vpop.f32.mrb[0].mxu0
        %1163 = vmatprep.mubr.f32.mxu0 0.0
        %1164 = vmatmul.mubr.f32.gmra.mrb[0].mxu0 %v1058
        %v1165 = vpop.f32.mrb[0].mxu0
        %v1166 = vadd.f32 0.0, %v1165
        %v1167 = vpop.f32.mrb[0].mxu0
        %1168 = vmatprep.mubr.f32.mxu0 0.0
        %1169 = vmatmul.mubr.f32.gmra.mrb[0].mxu0 %v1059
        %v1170 = vpop.f32.mrb[0].mxu0
        %v1171 = vadd.f32 0.0, %v1170
        %v1172 = vpop.f32.mrb[0].mxu0
        %1173 = vmatprep.mubr.f32.mxu0 0.0
        %1174 = vmatmul.mubr.f32.gmra.mrb[0].mxu0 %v1060
        %v1175 = vpop.f32.mrb[0].mxu0
        %v1176 = vadd.f32 0.0, %v1175
        %v1177 = vpop.f32.mrb[0].mxu0
        %1178 = vmatprep.mubr.f32.mxu0 0.0
        %1179 = vmatmul.mubr.f32.gmra.mrb[0].mxu0 %v1061
        %v1180 = vpop.f32.mrb[0].mxu0
        %v1181 = vadd.f32 0.0, %v1180
        %v1182 = vpop.f32.mrb[0].mxu0
        %1183 = vdwg.mxu0
        %v1184 = vadd.f32 %v1046, %v1146
        %v1185 = vadd.f32 %v1047, %v1151
        %v1186 = vadd.f32 %v1048, %v1156
        %v1187 = vadd.f32 %v1049, %v1161
        %v1188 = vadd.f32 %v1050, %v1166
        %v1189 = vadd.f32 %v1051, %v1171
        %v1190 = vadd.f32 %v1052, %v1176
        %v1191 = vadd.f32 %v1053, %v1181
        %v1192 = vld [vmem:[%s510 + $0x2] sm:$0xff]
        %v1193 = vld [vmem:[%s510 + $0x12] sm:$0xff]
        %v1194 = vld [vmem:[%s510 + $0x22] sm:$0xff]
        %v1195 = vld [vmem:[%s510 + $0x32] sm:$0xff]
        %v1196 = vld [vmem:[%s510 + $0x42] sm:$0xff]
        %v1197 = vld [vmem:[%s510 + $0x52] sm:$0xff]
        %v1198 = vld [vmem:[%s510 + $0x62] sm:$0xff]
        %v1199 = vld [vmem:[%s510 + $0x72] sm:$0xff]
        %s1200 = scalar_lea.vmem [#allocation8], 640
        %v1201 = vld [vmem:[%s1200] sm:$0xff]
        %v1202 = vld [vmem:[%s1200 + $0x8] sm:$0xff]
        %v1203 = vld [vmem:[%s1200 + $0x10] sm:$0xff]
        %v1204 = vld [vmem:[%s1200 + $0x18] sm:$0xff]
        %v1205 = vld [vmem:[%s1200 + $0x20] sm:$0xff]
        %v1206 = vld [vmem:[%s1200 + $0x28] sm:$0xff]
        %v1207 = vld [vmem:[%s1200 + $0x30] sm:$0xff]
        %v1208 = vld [vmem:[%s1200 + $0x38] sm:$0xff]
        %v1209 = vld [vmem:[%s1200 + $0x40] sm:$0xff]
        %v1210 = vld [vmem:[%s1200 + $0x48] sm:$0xff]
        %v1211 = vld [vmem:[%s1200 + $0x50] sm:$0xff]
        %v1212 = vld [vmem:[%s1200 + $0x58] sm:$0xff]
        %v1213 = vld [vmem:[%s1200 + $0x60] sm:$0xff]
        %v1214 = vld [vmem:[%s1200 + $0x68] sm:$0xff]
        %v1215 = vld [vmem:[%s1200 + $0x70] sm:$0xff]
        %v1216 = vld [vmem:[%s1200 + $0x78] sm:$0xff]
        %1217 = vmatprep.subr.mxu0 0.0
        %1218 = vmatpush1.msra.mxu0 %v1201
        %1219 = vmatprep.subr.mxu0 0.0
        %1220 = vmatpush1.msra.mxu0 %v1202
        %1221 = vmatprep.subr.mxu0 0.0
        %1222 = vmatpush1.msra.mxu0 %v1203
        %1223 = vmatprep.subr.mxu0 0.0
        %1224 = vmatpush1.msra.mxu0 %v1204
        %1225 = vmatprep.subr.mxu0 0.0
        %1226 = vmatpush1.msra.mxu0 %v1205
        %1227 = vmatprep.subr.mxu0 0.0
        %1228 = vmatpush1.msra.mxu0 %v1206
        %1229 = vmatprep.subr.mxu0 0.0
        %1230 = vmatpush1.msra.mxu0 %v1207
        %1231 = vmatprep.subr.mxu0 0.0
        %1232 = vmatpush1.msra.mxu0 %v1208
        %1233 = vmatprep.subr.mxu0 0.0
        %1234 = vmatpush1.msra.mxu0 %v1209
        %1235 = vmatprep.subr.mxu0 0.0
        %1236 = vmatpush1.msra.mxu0 %v1210
        %1237 = vmatprep.subr.mxu0 0.0
        %1238 = vmatpush1.msra.mxu0 %v1211
        %1239 = vmatprep.subr.mxu0 0.0
        %1240 = vmatpush1.msra.mxu0 %v1212
        %1241 = vmatprep.subr.mxu0 0.0
        %1242 = vmatpush1.msra.mxu0 %v1213
        %1243 = vmatprep.subr.mxu0 0.0
        %1244 = vmatpush1.msra.mxu0 %v1214
        %1245 = vmatprep.subr.mxu0 0.0
        %1246 = vmatpush1.msra.mxu0 %v1215
        %1247 = vmatprep.subr.mxu0 0.0
        %1248 = vmatpush1.msra.mxu0 %v1216
        %1249 = vmatprep.subr.mxu0 0.0
        %1250 = vmatpush1.msra.mxu0 0.0
        %1251 = vmatprep.subr.mxu0 0.0
        %1252 = vmatpush1.msra.mxu0 0.0
        %1253 = vmatprep.subr.mxu0 0.0
        %1254 = vmatpush1.msra.mxu0 0.0
        %1255 = vmatprep.subr.mxu0 0.0
        %1256 = vmatpush1.msra.mxu0 0.0
        %1257 = vmatprep.subr.mxu0 0.0
        %1258 = vmatpush1.msra.mxu0 0.0
        %1259 = vmatprep.subr.mxu0 0.0
        %1260 = vmatpush1.msra.mxu0 0.0
        %1261 = vmatprep.subr.mxu0 0.0
        %1262 = vmatpush1.msra.mxu0 0.0
        %1263 = vmatprep.subr.mxu0 0.0
        %1264 = vmatpush1.msra.mxu0 0.0
        %1265 = vmatprep.subr.mxu0 0.0
        %1266 = vmatpush1.msra.mxu0 0.0
        %1267 = vmatprep.subr.mxu0 0.0
        %1268 = vmatpush1.msra.mxu0 0.0
        %1269 = vmatprep.subr.mxu0 0.0
        %1270 = vmatpush1.msra.mxu0 0.0
        %1271 = vmatprep.subr.mxu0 0.0
        %1272 = vmatpush1.msra.mxu0 0.0
        %1273 = vmatprep.subr.mxu0 0.0
        %1274 = vmatpush1.msra.mxu0 0.0
        %1275 = vmatprep.subr.mxu0 0.0
        %1276 = vmatpush1.msra.mxu0 0.0
        %1277 = vmatprep.subr.mxu0 0.0
        %1278 = vmatpush1.msra.mxu0 0.0
        %1279 = vmatprep.subr.mxu0 0.0
        %1280 = vmatpush1.msra.mxu0 0.0
        %1281 = vmatprep.mubr.f32.mxu0 0.0
        %1282 = vmatmul.mubr.f32.gmra.mrb[0].mxu0 %v1192
        %v1283 = vpop.f32.mrb[0].mxu0
        %v1284 = vadd.f32 0.0, %v1283
        %v1285 = vpop.f32.mrb[0].mxu0
        %1286 = vmatprep.mubr.f32.mxu0 0.0
        %1287 = vmatmul.mubr.f32.gmra.mrb[0].mxu0 %v1193
        %v1288 = vpop.f32.mrb[0].mxu0
        %v1289 = vadd.f32 0.0, %v1288
        %v1290 = vpop.f32.mrb[0].mxu0
        %1291 = vmatprep.mubr.f32.mxu0 0.0
        %1292 = vmatmul.mubr.f32.gmra.mrb[0].mxu0 %v1194
        %v1293 = vpop.f32.mrb[0].mxu0
        %v1294 = vadd.f32 0.0, %v1293
        %v1295 = vpop.f32.mrb[0].mxu0
        %1296 = vmatprep.mubr.f32.mxu0 0.0
        %1297 = vmatmul.mubr.f32.gmra.mrb[0].mxu0 %v1195
        %v1298 = vpop.f32.mrb[0].mxu0
        %v1299 = vadd.f32 0.0, %v1298
        %v1300 = vpop.f32.mrb[0].mxu0
        %1301 = vmatprep.mubr.f32.mxu0 0.0
        %1302 = vmatmul.mubr.f32.gmra.mrb[0].mxu0 %v1196
        %v1303 = vpop.f32.mrb[0].mxu0
        %v1304 = vadd.f32 0.0, %v1303
        %v1305 = vpop.f32.mrb[0].mxu0
        %1306 = vmatprep.mubr.f32.mxu0 0.0
        %1307 = vmatmul.mubr.f32.gmra.mrb[0].mxu0 %v1197
        %v1308 = vpop.f32.mrb[0].mxu0
        %v1309 = vadd.f32 0.0, %v1308
        %v1310 = vpop.f32.mrb[0].mxu0
        %1311 = vmatprep.mubr.f32.mxu0 0.0
        %1312 = vmatmul.mubr.f32.gmra.mrb[0].mxu0 %v1198
        %v1313 = vpop.f32.mrb[0].mxu0
        %v1314 = vadd.f32 0.0, %v1313
        %v1315 = vpop.f32.mrb[0].mxu0
        %1316 = vmatprep.mubr.f32.mxu0 0.0
        %1317 = vmatmul.mubr.f32.gmra.mrb[0].mxu0 %v1199
        %v1318 = vpop.f32.mrb[0].mxu0
        %v1319 = vadd.f32 0.0, %v1318
        %v1320 = vpop.f32.mrb[0].mxu0
        %1321 = vdwg.mxu0
        %v1322 = vadd.f32 %v1184, %v1284
        %v1323 = vadd.f32 %v1185, %v1289
        %v1324 = vadd.f32 %v1186, %v1294
        %v1325 = vadd.f32 %v1187, %v1299
        %v1326 = vadd.f32 %v1188, %v1304
        %v1327 = vadd.f32 %v1189, %v1309
        %v1328 = vadd.f32 %v1190, %v1314
        %v1329 = vadd.f32 %v1191, %v1319
        %s1330 = scalar_lea.vmem [#allocation2], 32
        %v1331 = vld [vmem:[%s1330] sm:$0xff]
        %v1332 = vld [vmem:[%s1330 + $0x10] sm:$0xff]
        %v1333 = vld [vmem:[%s1330 + $0x20] sm:$0xff]
        %v1334 = vld [vmem:[%s1330 + $0x30] sm:$0xff]
        %v1335 = vld [vmem:[%s1330 + $0x40] sm:$0xff]
        %v1336 = vld [vmem:[%s1330 + $0x50] sm:$0xff]
        %v1337 = vld [vmem:[%s1330 + $0x60] sm:$0xff]
        %v1338 = vld [vmem:[%s1330 + $0x70] sm:$0xff]
        %s1339 = scalar_lea.vmem [#allocation8], 768
        %v1340 = vld [vmem:[%s1339] sm:$0xff]
        %v1341 = vld [vmem:[%s1339 + $0x8] sm:$0xff]
        %v1342 = vld [vmem:[%s1339 + $0x10] sm:$0xff]
        %v1343 = vld [vmem:[%s1339 + $0x18] sm:$0xff]
        %v1344 = vld [vmem:[%s1339 + $0x20] sm:$0xff]
        %v1345 = vld [vmem:[%s1339 + $0x28] sm:$0xff]
        %v1346 = vld [vmem:[%s1339 + $0x30] sm:$0xff]
        %v1347 = vld [vmem:[%s1339 + $0x38] sm:$0xff]
        %v1348 = vld [vmem:[%s1339 + $0x40] sm:$0xff]
        %v1349 = vld [vmem:[%s1339 + $0x48] sm:$0xff]
        %v1350 = vld [vmem:[%s1339 + $0x50] sm:$0xff]
        %v1351 = vld [vmem:[%s1339 + $0x58] sm:$0xff]
        %v1352 = vld [vmem:[%s1339 + $0x60] sm:$0xff]
        %v1353 = vld [vmem:[%s1339 + $0x68] sm:$0xff]
        %v1354 = vld [vmem:[%s1339 + $0x70] sm:$0xff]
        %v1355 = vld [vmem:[%s1339 + $0x78] sm:$0xff]
        %1356 = vmatprep.subr.mxu0 0.0
        %1357 = vmatpush1.msra.mxu0 %v1340
        %1358 = vmatprep.subr.mxu0 0.0
        %1359 = vmatpush1.msra.mxu0 %v1341
        %1360 = vmatprep.subr.mxu0 0.0
        %1361 = vmatpush1.msra.mxu0 %v1342
        %1362 = vmatprep.subr.mxu0 0.0
        %1363 = vmatpush1.msra.mxu0 %v1343
        %1364 = vmatprep.subr.mxu0 0.0
        %1365 = vmatpush1.msra.mxu0 %v1344
        %1366 = vmatprep.subr.mxu0 0.0
        %1367 = vmatpush1.msra.mxu0 %v1345
        %1368 = vmatprep.subr.mxu0 0.0
        %1369 = vmatpush1.msra.mxu0 %v1346
        %1370 = vmatprep.subr.mxu0 0.0
        %1371 = vmatpush1.msra.mxu0 %v1347
        %1372 = vmatprep.subr.mxu0 0.0
        %1373 = vmatpush1.msra.mxu0 %v1348
        %1374 = vmatprep.subr.mxu0 0.0
        %1375 = vmatpush1.msra.mxu0 %v1349
        %1376 = vmatprep.subr.mxu0 0.0
        %1377 = vmatpush1.msra.mxu0 %v1350
        %1378 = vmatprep.subr.mxu0 0.0
        %1379 = vmatpush1.msra.mxu0 %v1351
        %1380 = vmatprep.subr.mxu0 0.0
        %1381 = vmatpush1.msra.mxu0 %v1352
        %1382 = vmatprep.subr.mxu0 0.0
        %1383 = vmatpush1.msra.mxu0 %v1353
        %1384 = vmatprep.subr.mxu0 0.0
        %1385 = vmatpush1.msra.mxu0 %v1354
        %1386 = vmatprep.subr.mxu0 0.0
        %1387 = vmatpush1.msra.mxu0 %v1355
        %1388 = vmatprep.subr.mxu0 0.0
        %1389 = vmatpush1.msra.mxu0 0.0
        %1390 = vmatprep.subr.mxu0 0.0
        %1391 = vmatpush1.msra.mxu0 0.0
        %1392 = vmatprep.subr.mxu0 0.0
        %1393 = vmatpush1.msra.mxu0 0.0
        %1394 = vmatprep.subr.mxu0 0.0
        %1395 = vmatpush1.msra.mxu0 0.0
        %1396 = vmatprep.subr.mxu0 0.0
        %1397 = vmatpush1.msra.mxu0 0.0
        %1398 = vmatprep.subr.mxu0 0.0
        %1399 = vmatpush1.msra.mxu0 0.0
        %1400 = vmatprep.subr.mxu0 0.0
        %1401 = vmatpush1.msra.mxu0 0.0
        %1402 = vmatprep.subr.mxu0 0.0
        %1403 = vmatpush1.msra.mxu0 0.0
        %1404 = vmatprep.subr.mxu0 0.0
        %1405 = vmatpush1.msra.mxu0 0.0
        %1406 = vmatprep.subr.mxu0 0.0
        %1407 = vmatpush1.msra.mxu0 0.0
        %1408 = vmatprep.subr.mxu0 0.0
        %1409 = vmatpush1.msra.mxu0 0.0
        %1410 = vmatprep.subr.mxu0 0.0
        %1411 = vmatpush1.msra.mxu0 0.0
        %1412 = vmatprep.subr.mxu0 0.0
        %1413 = vmatpush1.msra.mxu0 0.0
        %1414 = vmatprep.subr.mxu0 0.0
        %1415 = vmatpush1.msra.mxu0 0.0
        %1416 = vmatprep.subr.mxu0 0.0
        %1417 = vmatpush1.msra.mxu0 0.0
        %1418 = vmatprep.subr.mxu0 0.0
        %1419 = vmatpush1.msra.mxu0 0.0
        %1420 = vmatprep.mubr.f32.mxu0 0.0
        %1421 = vmatmul.mubr.f32.gmra.mrb[0].mxu0 %v1331
        %v1422 = vpop.f32.mrb[0].mxu0
        %v1423 = vadd.f32 0.0, %v1422
        %v1424 = vpop.f32.mrb[0].mxu0
        %1425 = vmatprep.mubr.f32.mxu0 0.0
        %1426 = vmatmul.mubr.f32.gmra.mrb[0].mxu0 %v1332
        %v1427 = vpop.f32.mrb[0].mxu0
        %v1428 = vadd.f32 0.0, %v1427
        %v1429 = vpop.f32.mrb[0].mxu0
        %1430 = vmatprep.mubr.f32.mxu0 0.0
        %1431 = vmatmul.mubr.f32.gmra.mrb[0].mxu0 %v1333
        %v1432 = vpop.f32.mrb[0].mxu0
        %v1433 = vadd.f32 0.0, %v1432
        %v1434 = vpop.f32.mrb[0].mxu0
        %1435 = vmatprep.mubr.f32.mxu0 0.0
        %1436 = vmatmul.mubr.f32.gmra.mrb[0].mxu0 %v1334
        %v1437 = vpop.f32.mrb[0].mxu0
        %v1438 = vadd.f32 0.0, %v1437
        %v1439 = vpop.f32.mrb[0].mxu0
        %1440 = vmatprep.mubr.f32.mxu0 0.0
        %1441 = vmatmul.mubr.f32.gmra.mrb[0].mxu0 %v1335
        %v1442 = vpop.f32.mrb[0].mxu0
        %v1443 = vadd.f32 0.0, %v1442
        %v1444 = vpop.f32.mrb[0].mxu0
        %1445 = vmatprep.mubr.f32.mxu0 0.0
        %1446 = vmatmul.mubr.f32.gmra.mrb[0].mxu0 %v1336
        %v1447 = vpop.f32.mrb[0].mxu0
        %v1448 = vadd.f32 0.0, %v1447
        %v1449 = vpop.f32.mrb[0].mxu0
        %1450 = vmatprep.mubr.f32.mxu0 0.0
        %1451 = vmatmul.mubr.f32.gmra.mrb[0].mxu0 %v1337
        %v1452 = vpop.f32.mrb[0].mxu0
        %v1453 = vadd.f32 0.0, %v1452
        %v1454 = vpop.f32.mrb[0].mxu0
        %1455 = vmatprep.mubr.f32.mxu0 0.0
        %1456 = vmatmul.mubr.f32.gmra.mrb[0].mxu0 %v1338
        %v1457 = vpop.f32.mrb[0].mxu0
        %v1458 = vadd.f32 0.0, %v1457
        %v1459 = vpop.f32.mrb[0].mxu0
        %1460 = vdwg.mxu0
        %v1461 = vadd.f32 %v1322, %v1423
        %v1462 = vadd.f32 %v1323, %v1428
        %v1463 = vadd.f32 %v1324, %v1433
        %v1464 = vadd.f32 %v1325, %v1438
        %v1465 = vadd.f32 %v1326, %v1443
        %v1466 = vadd.f32 %v1327, %v1448
        %v1467 = vadd.f32 %v1328, %v1453
        %v1468 = vadd.f32 %v1329, %v1458
        %v1469 = vld [vmem:[%s1330 + $0x1] sm:$0xff]
        %v1470 = vld [vmem:[%s1330 + $0x11] sm:$0xff]
        %v1471 = vld [vmem:[%s1330 + $0x21] sm:$0xff]
        %v1472 = vld [vmem:[%s1330 + $0x31] sm:$0xff]
        %v1473 = vld [vmem:[%s1330 + $0x41] sm:$0xff]
        %v1474 = vld [vmem:[%s1330 + $0x51] sm:$0xff]
        %v1475 = vld [vmem:[%s1330 + $0x61] sm:$0xff]
        %v1476 = vld [vmem:[%s1330 + $0x71] sm:$0xff]
        %s1477 = scalar_lea.vmem [#allocation8], 896
        %v1478 = vld [vmem:[%s1477] sm:$0xff]
        %v1479 = vld [vmem:[%s1477 + $0x8] sm:$0xff]
        %v1480 = vld [vmem:[%s1477 + $0x10] sm:$0xff]
        %v1481 = vld [vmem:[%s1477 + $0x18] sm:$0xff]
        %v1482 = vld [vmem:[%s1477 + $0x20] sm:$0xff]
        %v1483 = vld [vmem:[%s1477 + $0x28] sm:$0xff]
        %v1484 = vld [vmem:[%s1477 + $0x30] sm:$0xff]
        %v1485 = vld [vmem:[%s1477 + $0x38] sm:$0xff]
        %v1486 = vld [vmem:[%s1477 + $0x40] sm:$0xff]
        %v1487 = vld [vmem:[%s1477 + $0x48] sm:$0xff]
        %v1488 = vld [vmem:[%s1477 + $0x50] sm:$0xff]
        %v1489 = vld [vmem:[%s1477 + $0x58] sm:$0xff]
        %v1490 = vld [vmem:[%s1477 + $0x60] sm:$0xff]
        %v1491 = vld [vmem:[%s1477 + $0x68] sm:$0xff]
        %v1492 = vld [vmem:[%s1477 + $0x70] sm:$0xff]
        %v1493 = vld [vmem:[%s1477 + $0x78] sm:$0xff]
        %1494 = vmatprep.subr.mxu0 0.0
        %1495 = vmatpush1.msra.mxu0 %v1478
        %1496 = vmatprep.subr.mxu0 0.0
        %1497 = vmatpush1.msra.mxu0 %v1479
        %1498 = vmatprep.subr.mxu0 0.0
        %1499 = vmatpush1.msra.mxu0 %v1480
        %1500 = vmatprep.subr.mxu0 0.0
        %1501 = vmatpush1.msra.mxu0 %v1481
        %1502 = vmatprep.subr.mxu0 0.0
        %1503 = vmatpush1.msra.mxu0 %v1482
        %1504 = vmatprep.subr.mxu0 0.0
        %1505 = vmatpush1.msra.mxu0 %v1483
        %1506 = vmatprep.subr.mxu0 0.0
        %1507 = vmatpush1.msra.mxu0 %v1484
        %1508 = vmatprep.subr.mxu0 0.0
        %1509 = vmatpush1.msra.mxu0 %v1485
        %1510 = vmatprep.subr.mxu0 0.0
        %1511 = vmatpush1.msra.mxu0 %v1486
        %1512 = vmatprep.subr.mxu0 0.0
        %1513 = vmatpush1.msra.mxu0 %v1487
        %1514 = vmatprep.subr.mxu0 0.0
        %1515 = vmatpush1.msra.mxu0 %v1488
        %1516 = vmatprep.subr.mxu0 0.0
        %1517 = vmatpush1.msra.mxu0 %v1489
        %1518 = vmatprep.subr.mxu0 0.0
        %1519 = vmatpush1.msra.mxu0 %v1490
        %1520 = vmatprep.subr.mxu0 0.0
        %1521 = vmatpush1.msra.mxu0 %v1491
        %1522 = vmatprep.subr.mxu0 0.0
        %1523 = vmatpush1.msra.mxu0 %v1492
        %1524 = vmatprep.subr.mxu0 0.0
        %1525 = vmatpush1.msra.mxu0 %v1493
        %1526 = vmatprep.subr.mxu0 0.0
        %1527 = vmatpush1.msra.mxu0 0.0
        %1528 = vmatprep.subr.mxu0 0.0
        %1529 = vmatpush1.msra.mxu0 0.0
        %1530 = vmatprep.subr.mxu0 0.0
        %1531 = vmatpush1.msra.mxu0 0.0
        %1532 = vmatprep.subr.mxu0 0.0
        %1533 = vmatpush1.msra.mxu0 0.0
        %1534 = vmatprep.subr.mxu0 0.0
        %1535 = vmatpush1.msra.mxu0 0.0
        %1536 = vmatprep.subr.mxu0 0.0
        %1537 = vmatpush1.msra.mxu0 0.0
        %1538 = vmatprep.subr.mxu0 0.0
        %1539 = vmatpush1.msra.mxu0 0.0
        %1540 = vmatprep.subr.mxu0 0.0
        %1541 = vmatpush1.msra.mxu0 0.0
        %1542 = vmatprep.subr.mxu0 0.0
        %1543 = vmatpush1.msra.mxu0 0.0
        %1544 = vmatprep.subr.mxu0 0.0
        %1545 = vmatpush1.msra.mxu0 0.0
        %1546 = vmatprep.subr.mxu0 0.0
        %1547 = vmatpush1.msra.mxu0 0.0
        %1548 = vmatprep.subr.mxu0 0.0
        %1549 = vmatpush1.msra.mxu0 0.0
        %1550 = vmatprep.subr.mxu0 0.0
        %1551 = vmatpush1.msra.mxu0 0.0
        %1552 = vmatprep.subr.mxu0 0.0
        %1553 = vmatpush1.msra.mxu0 0.0
        %1554 = vmatprep.subr.mxu0 0.0
        %1555 = vmatpush1.msra.mxu0 0.0
        %1556 = vmatprep.subr.mxu0 0.0
        %1557 = vmatpush1.msra.mxu0 0.0
        %1558 = vmatprep.mubr.f32.mxu0 0.0
        %1559 = vmatmul.mubr.f32.gmra.mrb[0].mxu0 %v1469
        %v1560 = vpop.f32.mrb[0].mxu0
        %v1561 = vadd.f32 0.0, %v1560
        %v1562 = vpop.f32.mrb[0].mxu0
        %1563 = vmatprep.mubr.f32.mxu0 0.0
        %1564 = vmatmul.mubr.f32.gmra.mrb[0].mxu0 %v1470
        %v1565 = vpop.f32.mrb[0].mxu0
        %v1566 = vadd.f32 0.0, %v1565
        %v1567 = vpop.f32.mrb[0].mxu0
        %1568 = vmatprep.mubr.f32.mxu0 0.0
        %1569 = vmatmul.mubr.f32.gmra.mrb[0].mxu0 %v1471
        %v1570 = vpop.f32.mrb[0].mxu0
        %v1571 = vadd.f32 0.0, %v1570
        %v1572 = vpop.f32.mrb[0].mxu0
        %1573 = vmatprep.mubr.f32.mxu0 0.0
        %1574 = vmatmul.mubr.f32.gmra.mrb[0].mxu0 %v1472
        %v1575 = vpop.f32.mrb[0].mxu0
        %v1576 = vadd.f32 0.0, %v1575
        %v1577 = vpop.f32.mrb[0].mxu0
        %1578 = vmatprep.mubr.f32.mxu0 0.0
        %1579 = vmatmul.mubr.f32.gmra.mrb[0].mxu0 %v1473
        %v1580 = vpop.f32.mrb[0].mxu0
        %v1581 = vadd.f32 0.0, %v1580
        %v1582 = vpop.f32.mrb[0].mxu0
        %1583 = vmatprep.mubr.f32.mxu0 0.0
        %1584 = vmatmul.mubr.f32.gmra.mrb[0].mxu0 %v1474
        %v1585 = vpop.f32.mrb[0].mxu0
        %v1586 = vadd.f32 0.0, %v1585
        %v1587 = vpop.f32.mrb[0].mxu0
        %1588 = vmatprep.mubr.f32.mxu0 0.0
        %1589 = vmatmul.mubr.f32.gmra.mrb[0].mxu0 %v1475
        %v1590 = vpop.f32.mrb[0].mxu0
        %v1591 = vadd.f32 0.0, %v1590
        %v1592 = vpop.f32.mrb[0].mxu0
        %1593 = vmatprep.mubr.f32.mxu0 0.0
        %1594 = vmatmul.mubr.f32.gmra.mrb[0].mxu0 %v1476
        %v1595 = vpop.f32.mrb[0].mxu0
        %v1596 = vadd.f32 0.0, %v1595
        %v1597 = vpop.f32.mrb[0].mxu0
        %1598 = vdwg.mxu0
        %v1599 = vadd.f32 %v1461, %v1561
        %v1600 = vadd.f32 %v1462, %v1566
        %v1601 = vadd.f32 %v1463, %v1571
        %v1602 = vadd.f32 %v1464, %v1576
        %v1603 = vadd.f32 %v1465, %v1581
        %v1604 = vadd.f32 %v1466, %v1586
        %v1605 = vadd.f32 %v1467, %v1591
        %v1606 = vadd.f32 %v1468, %v1596
        %v1607 = vld [vmem:[%s1330 + $0x2] sm:$0xff]
        %v1608 = vld [vmem:[%s1330 + $0x12] sm:$0xff]
        %v1609 = vld [vmem:[%s1330 + $0x22] sm:$0xff]
        %v1610 = vld [vmem:[%s1330 + $0x32] sm:$0xff]
        %v1611 = vld [vmem:[%s1330 + $0x42] sm:$0xff]
        %v1612 = vld [vmem:[%s1330 + $0x52] sm:$0xff]
        %v1613 = vld [vmem:[%s1330 + $0x62] sm:$0xff]
        %v1614 = vld [vmem:[%s1330 + $0x72] sm:$0xff]
        %s1615 = scalar_lea.vmem [#allocation8], 1024
        %v1616 = vld [vmem:[%s1615] sm:$0xff]
        %v1617 = vld [vmem:[%s1615 + $0x8] sm:$0xff]
        %v1618 = vld [vmem:[%s1615 + $0x10] sm:$0xff]
        %v1619 = vld [vmem:[%s1615 + $0x18] sm:$0xff]
        %v1620 = vld [vmem:[%s1615 + $0x20] sm:$0xff]
        %v1621 = vld [vmem:[%s1615 + $0x28] sm:$0xff]
        %v1622 = vld [vmem:[%s1615 + $0x30] sm:$0xff]
        %v1623 = vld [vmem:[%s1615 + $0x38] sm:$0xff]
        %v1624 = vld [vmem:[%s1615 + $0x40] sm:$0xff]
        %v1625 = vld [vmem:[%s1615 + $0x48] sm:$0xff]
        %v1626 = vld [vmem:[%s1615 + $0x50] sm:$0xff]
        %v1627 = vld [vmem:[%s1615 + $0x58] sm:$0xff]
        %v1628 = vld [vmem:[%s1615 + $0x60] sm:$0xff]
        %v1629 = vld [vmem:[%s1615 + $0x68] sm:$0xff]
        %v1630 = vld [vmem:[%s1615 + $0x70] sm:$0xff]
        %v1631 = vld [vmem:[%s1615 + $0x78] sm:$0xff]
        %1632 = vmatprep.subr.mxu0 0.0
        %1633 = vmatpush1.msra.mxu0 %v1616
        %1634 = vmatprep.subr.mxu0 0.0
        %1635 = vmatpush1.msra.mxu0 %v1617
        %1636 = vmatprep.subr.mxu0 0.0
        %1637 = vmatpush1.msra.mxu0 %v1618
        %1638 = vmatprep.subr.mxu0 0.0
        %1639 = vmatpush1.msra.mxu0 %v1619
        %1640 = vmatprep.subr.mxu0 0.0
        %1641 = vmatpush1.msra.mxu0 %v1620
        %1642 = vmatprep.subr.mxu0 0.0
        %1643 = vmatpush1.msra.mxu0 %v1621
        %1644 = vmatprep.subr.mxu0 0.0
        %1645 = vmatpush1.msra.mxu0 %v1622
        %1646 = vmatprep.subr.mxu0 0.0
        %1647 = vmatpush1.msra.mxu0 %v1623
        %1648 = vmatprep.subr.mxu0 0.0
        %1649 = vmatpush1.msra.mxu0 %v1624
        %1650 = vmatprep.subr.mxu0 0.0
        %1651 = vmatpush1.msra.mxu0 %v1625
        %1652 = vmatprep.subr.mxu0 0.0
        %1653 = vmatpush1.msra.mxu0 %v1626
        %1654 = vmatprep.subr.mxu0 0.0
        %1655 = vmatpush1.msra.mxu0 %v1627
        %1656 = vmatprep.subr.mxu0 0.0
        %1657 = vmatpush1.msra.mxu0 %v1628
        %1658 = vmatprep.subr.mxu0 0.0
        %1659 = vmatpush1.msra.mxu0 %v1629
        %1660 = vmatprep.subr.mxu0 0.0
        %1661 = vmatpush1.msra.mxu0 %v1630
        %1662 = vmatprep.subr.mxu0 0.0
        %1663 = vmatpush1.msra.mxu0 %v1631
        %1664 = vmatprep.subr.mxu0 0.0
        %1665 = vmatpush1.msra.mxu0 0.0
        %1666 = vmatprep.subr.mxu0 0.0
        %1667 = vmatpush1.msra.mxu0 0.0
        %1668 = vmatprep.subr.mxu0 0.0
        %1669 = vmatpush1.msra.mxu0 0.0
        %1670 = vmatprep.subr.mxu0 0.0
        %1671 = vmatpush1.msra.mxu0 0.0
        %1672 = vmatprep.subr.mxu0 0.0
        %1673 = vmatpush1.msra.mxu0 0.0
        %1674 = vmatprep.subr.mxu0 0.0
        %1675 = vmatpush1.msra.mxu0 0.0
        %1676 = vmatprep.subr.mxu0 0.0
        %1677 = vmatpush1.msra.mxu0 0.0
        %1678 = vmatprep.subr.mxu0 0.0
        %1679 = vmatpush1.msra.mxu0 0.0
        %1680 = vmatprep.subr.mxu0 0.0
        %1681 = vmatpush1.msra.mxu0 0.0
        %1682 = vmatprep.subr.mxu0 0.0
        %1683 = vmatpush1.msra.mxu0 0.0
        %1684 = vmatprep.subr.mxu0 0.0
        %1685 = vmatpush1.msra.mxu0 0.0
        %1686 = vmatprep.subr.mxu0 0.0
        %1687 = vmatpush1.msra.mxu0 0.0
        %1688 = vmatprep.subr.mxu0 0.0
        %1689 = vmatpush1.msra.mxu0 0.0
        %1690 = vmatprep.subr.mxu0 0.0
        %1691 = vmatpush1.msra.mxu0 0.0
        %1692 = vmatprep.subr.mxu0 0.0
        %1693 = vmatpush1.msra.mxu0 0.0
        %1694 = vmatprep.subr.mxu0 0.0
        %1695 = vmatpush1.msra.mxu0 0.0
        %1696 = vmatprep.mubr.f32.mxu0 0.0
        %1697 = vmatmul.mubr.f32.gmra.mrb[0].mxu0 %v1607
        %v1698 = vpop.f32.mrb[0].mxu0
        %v1699 = vadd.f32 0.0, %v1698
        %v1700 = vpop.f32.mrb[0].mxu0
        %1701 = vmatprep.mubr.f32.mxu0 0.0
        %1702 = vmatmul.mubr.f32.gmra.mrb[0].mxu0 %v1608
        %v1703 = vpop.f32.mrb[0].mxu0
        %v1704 = vadd.f32 0.0, %v1703
        %v1705 = vpop.f32.mrb[0].mxu0
        %1706 = vmatprep.mubr.f32.mxu0 0.0
        %1707 = vmatmul.mubr.f32.gmra.mrb[0].mxu0 %v1609
        %v1708 = vpop.f32.mrb[0].mxu0
        %v1709 = vadd.f32 0.0, %v1708
        %v1710 = vpop.f32.mrb[0].mxu0
        %1711 = vmatprep.mubr.f32.mxu0 0.0
        %1712 = vmatmul.mubr.f32.gmra.mrb[0].mxu0 %v1610
        %v1713 = vpop.f32.mrb[0].mxu0
        %v1714 = vadd.f32 0.0, %v1713
        %v1715 = vpop.f32.mrb[0].mxu0
        %1716 = vmatprep.mubr.f32.mxu0 0.0
        %1717 = vmatmul.mubr.f32.gmra.mrb[0].mxu0 %v1611
        %v1718 = vpop.f32.mrb[0].mxu0
        %v1719 = vadd.f32 0.0, %v1718
        %v1720 = vpop.f32.mrb[0].mxu0
        %1721 = vmatprep.mubr.f32.mxu0 0.0
        %1722 = vmatmul.mubr.f32.gmra.mrb[0].mxu0 %v1612
        %v1723 = vpop.f32.mrb[0].mxu0
        %v1724 = vadd.f32 0.0, %v1723
        %v1725 = vpop.f32.mrb[0].mxu0
        %1726 = vmatprep.mubr.f32.mxu0 0.0
        %1727 = vmatmul.mubr.f32.gmra.mrb[0].mxu0 %v1613
        %v1728 = vpop.f32.mrb[0].mxu0
        %v1729 = vadd.f32 0.0, %v1728
        %v1730 = vpop.f32.mrb[0].mxu0
        %1731 = vmatprep.mubr.f32.mxu0 0.0
        %1732 = vmatmul.mubr.f32.gmra.mrb[0].mxu0 %v1614
        %v1733 = vpop.f32.mrb[0].mxu0
        %v1734 = vadd.f32 0.0, %v1733
        %v1735 = vpop.f32.mrb[0].mxu0
        %1736 = vdwg.mxu0
        %v1737 = vadd.f32 %v1599, %v1699
        %v1738 = vadd.f32 %v1600, %v1704
        %v1739 = vadd.f32 %v1601, %v1709
        %v1740 = vadd.f32 %v1602, %v1714
        %v1741 = vadd.f32 %v1603, %v1719
        %v1742 = vadd.f32 %v1604, %v1724
        %v1743 = vadd.f32 %v1605, %v1729
        %v1744 = vadd.f32 %v1606, %v1734
        %v1745 = vld [vmem:[%s4] sm:$0x1]
        %v1747 = vlaneseq
        %v1748 = vshrl.u32 %v1747, 7
        %v1749 = vsub.s32 0, %v1748
        %v1750 = vrot.slane %v1745, %v1749
        %v1752 = vadd.f32 %v1737, %v1750
        %v1753 = vadd.f32 %v1738, %v1750
        %v1754 = vadd.f32 %v1739, %v1750
        %v1755 = vadd.f32 %v1740, %v1750
        %v1756 = vadd.f32 %v1741, %v1750
        %v1757 = vadd.f32 %v1742, %v1750
        %v1758 = vadd.f32 %v1743, %v1750
        %v1759 = vadd.f32 %v1744, %v1750
        %v1760 = vmax.f32 %v1752, 0.0
        %v1761 = vmax.f32 %v1753, 0.0
        %v1762 = vmax.f32 %v1754, 0.0
        %v1763 = vmax.f32 %v1755, 0.0
        %v1764 = vmax.f32 %v1756, 0.0
        %v1765 = vmax.f32 %v1757, 0.0
        %v1766 = vmax.f32 %v1758, 0.0
        %v1767 = vmax.f32 %v1759, 0.0
        %v1768 = vld [vmem:[#allocation9] sm:$0xff]
        %v1769 = vld [vmem:[#allocation9 + $0x8] sm:$0xff]
        %v1770 = vld [vmem:[#allocation9 + $0x10] sm:$0xff]
        %v1771 = vld [vmem:[#allocation9 + $0x18] sm:$0xff]
        %v1772 = vld [vmem:[#allocation9 + $0x20] sm:$0xff]
        %v1773 = vld [vmem:[#allocation9 + $0x28] sm:$0xff]
        %v1774 = vld [vmem:[#allocation9 + $0x30] sm:$0xff]
        %v1775 = vld [vmem:[#allocation9 + $0x38] sm:$0xff]
        %v1776 = vld [vmem:[#allocation9 + $0x40] sm:$0xff]
        %v1777 = vld [vmem:[#allocation9 + $0x48] sm:$0xff]
        %v1778 = vld [vmem:[#allocation9 + $0x50] sm:$0xff]
        %v1779 = vld [vmem:[#allocation9 + $0x58] sm:$0xff]
        %v1780 = vld [vmem:[#allocation9 + $0x60] sm:$0xff]
        %v1781 = vld [vmem:[#allocation9 + $0x68] sm:$0xff]
        %v1782 = vld [vmem:[#allocation9 + $0x70] sm:$0xff]
        %v1783 = vld [vmem:[#allocation9 + $0x78] sm:$0xff]
        %v1784 = vld [vmem:[%s6] sm:$0x1]
        %v1786 = vlaneseq
        %v1787 = vshrl.u32 %v1786, 7
        %v1788 = vsub.s32 0, %v1787
        %v1789 = vrot.slane %v1784, %v1788
        %1791 = vmatprep.subr.mxu0 0.0
        %1792 = vmatpush1.msra.mxu0 %v1768
        %1793 = vmatprep.subr.mxu0 0.0
        %1794 = vmatpush1.msra.mxu0 %v1769
        %1795 = vmatprep.subr.mxu0 0.0
        %1796 = vmatpush1.msra.mxu0 %v1770
        %1797 = vmatprep.subr.mxu0 0.0
        %1798 = vmatpush1.msra.mxu0 %v1771
        %1799 = vmatprep.subr.mxu0 0.0
        %1800 = vmatpush1.msra.mxu0 %v1772
        %1801 = vmatprep.subr.mxu0 0.0
        %1802 = vmatpush1.msra.mxu0 %v1773
        %1803 = vmatprep.subr.mxu0 0.0
        %1804 = vmatpush1.msra.mxu0 %v1774
        %1805 = vmatprep.subr.mxu0 0.0
        %1806 = vmatpush1.msra.mxu0 %v1775
        %1807 = vmatprep.subr.mxu0 0.0
        %1808 = vmatpush1.msra.mxu0 %v1776
        %1809 = vmatprep.subr.mxu0 0.0
        %1810 = vmatpush1.msra.mxu0 %v1777
        %1811 = vmatprep.subr.mxu0 0.0
        %1812 = vmatpush1.msra.mxu0 %v1778
        %1813 = vmatprep.subr.mxu0 0.0
        %1814 = vmatpush1.msra.mxu0 %v1779
        %1815 = vmatprep.subr.mxu0 0.0
        %1816 = vmatpush1.msra.mxu0 %v1780
        %1817 = vmatprep.subr.mxu0 0.0
        %1818 = vmatpush1.msra.mxu0 %v1781
        %1819 = vmatprep.subr.mxu0 0.0
        %1820 = vmatpush1.msra.mxu0 %v1782
        %1821 = vmatprep.subr.mxu0 0.0
        %1822 = vmatpush1.msra.mxu0 %v1783
        %1823 = vmatprep.subr.mxu0 0.0
        %1824 = vmatpush1.msra.mxu0 0.0
        %1825 = vmatprep.subr.mxu0 0.0
        %1826 = vmatpush1.msra.mxu0 0.0
        %1827 = vmatprep.subr.mxu0 0.0
        %1828 = vmatpush1.msra.mxu0 0.0
        %1829 = vmatprep.subr.mxu0 0.0
        %1830 = vmatpush1.msra.mxu0 0.0
        %1831 = vmatprep.subr.mxu0 0.0
        %1832 = vmatpush1.msra.mxu0 0.0
        %1833 = vmatprep.subr.mxu0 0.0
        %1834 = vmatpush1.msra.mxu0 0.0
        %1835 = vmatprep.subr.mxu0 0.0
        %1836 = vmatpush1.msra.mxu0 0.0
        %1837 = vmatprep.subr.mxu0 0.0
        %1838 = vmatpush1.msra.mxu0 0.0
        %1839 = vmatprep.subr.mxu0 0.0
        %1840 = vmatpush1.msra.mxu0 0.0
        %1841 = vmatprep.subr.mxu0 0.0
        %1842 = vmatpush1.msra.mxu0 0.0
        %1843 = vmatprep.subr.mxu0 0.0
        %1844 = vmatpush1.msra.mxu0 0.0
        %1845 = vmatprep.subr.mxu0 0.0
        %1846 = vmatpush1.msra.mxu0 0.0
        %1847 = vmatprep.subr.mxu0 0.0
        %1848 = vmatpush1.msra.mxu0 0.0
        %1849 = vmatprep.subr.mxu0 0.0
        %1850 = vmatpush1.msra.mxu0 0.0
        %1851 = vmatprep.subr.mxu0 0.0
        %1852 = vmatpush1.msra.mxu0 0.0
        %1853 = vmatprep.subr.mxu0 0.0
        %1854 = vmatpush1.msra.mxu0 0.0
        %1855 = vmatprep.mubr.f32.mxu0 0.0
        %1856 = vmatmul.mubr.f32.gmra.mrb[0].mxu0 %v1760
        %v1857 = vpop.f32.mrb[0].mxu0
        %v1858 = vadd.f32 %v1789, %v1857
        %v1859 = vpop.f32.mrb[0].mxu0
        %1860 = vmatprep.mubr.f32.mxu0 0.0
        %1861 = vmatmul.mubr.f32.gmra.mrb[0].mxu0 %v1761
        %v1862 = vpop.f32.mrb[0].mxu0
        %v1863 = vadd.f32 %v1789, %v1862
        %v1864 = vpop.f32.mrb[0].mxu0
        %1865 = vmatprep.mubr.f32.mxu0 0.0
        %1866 = vmatmul.mubr.f32.gmra.mrb[0].mxu0 %v1762
        %v1867 = vpop.f32.mrb[0].mxu0
        %v1868 = vadd.f32 %v1789, %v1867
        %v1869 = vpop.f32.mrb[0].mxu0
        %1870 = vmatprep.mubr.f32.mxu0 0.0
        %1871 = vmatmul.mubr.f32.gmra.mrb[0].mxu0 %v1763
        %v1872 = vpop.f32.mrb[0].mxu0
        %v1873 = vadd.f32 %v1789, %v1872
        %v1874 = vpop.f32.mrb[0].mxu0
        %1875 = vmatprep.mubr.f32.mxu0 0.0
        %1876 = vmatmul.mubr.f32.gmra.mrb[0].mxu0 %v1764
        %v1877 = vpop.f32.mrb[0].mxu0
        %v1878 = vadd.f32 %v1789, %v1877
        %v1879 = vpop.f32.mrb[0].mxu0
        %1880 = vmatprep.mubr.f32.mxu0 0.0
        %1881 = vmatmul.mubr.f32.gmra.mrb[0].mxu0 %v1765
        %v1882 = vpop.f32.mrb[0].mxu0
        %v1883 = vadd.f32 %v1789, %v1882
        %v1884 = vpop.f32.mrb[0].mxu0
        %1885 = vmatprep.mubr.f32.mxu0 0.0
        %1886 = vmatmul.mubr.f32.gmra.mrb[0].mxu0 %v1766
        %v1887 = vpop.f32.mrb[0].mxu0
        %v1888 = vadd.f32 %v1789, %v1887
        %v1889 = vpop.f32.mrb[0].mxu0
        %1890 = vmatprep.mubr.f32.mxu0 0.0
        %1891 = vmatmul.mubr.f32.gmra.mrb[0].mxu0 %v1767
        %v1892 = vpop.f32.mrb[0].mxu0
        %v1893 = vadd.f32 %v1789, %v1892
        %v1894 = vpop.f32.mrb[0].mxu0
        %1895 = vdwg.mxu0
        %v1896 = vadd.f32 %v1858, %v341
        %v1897 = vadd.f32 %v1863, %v342
        %v1898 = vadd.f32 %v1868, %v343
        %v1899 = vadd.f32 %v1873, %v344
        %v1900 = vadd.f32 %v1878, %v345
        %v1901 = vadd.f32 %v1883, %v346
        %v1902 = vadd.f32 %v1888, %v347
        %v1903 = vadd.f32 %v1893, %v348
        %v1904 = vmax.f32 %v1896, 0.0
        %v1905 = vmax.f32 %v1897, 0.0
        %v1906 = vmax.f32 %v1898, 0.0
        %v1907 = vmax.f32 %v1899, 0.0
        %v1908 = vmax.f32 %v1900, 0.0
        %v1909 = vmax.f32 %v1901, 0.0
        %v1910 = vmax.f32 %v1902, 0.0
        %v1911 = vmax.f32 %v1903, 0.0
        %1912 = vst [vmem:[%s340] sm:$0xff] %v1904
        %1913 = vst [vmem:[%s340 + $0x8] sm:$0xff] %v1905
        %1914 = vst [vmem:[%s340 + $0x10] sm:$0xff] %v1906
        %1915 = vst [vmem:[%s340 + $0x18] sm:$0xff] %v1907
        %1916 = vst [vmem:[%s340 + $0x20] sm:$0xff] %v1908
        %1917 = vst [vmem:[%s340 + $0x28] sm:$0xff] %v1909
        %1918 = vst [vmem:[%s340 + $0x30] sm:$0xff] %v1910
        %1919 = vst [vmem:[%s340 + $0x38] sm:$0xff] %v1911
        %s1920 = sand.u32 %s186, 1
        %s1921 = scalar_lea.sflag [#allocation5], %s1920
        %s1922 = sand.u32 %s186, 1
        %s1923 = smul.addr %s1922, 64
        %s1924 = scalar_lea.vmem [#allocation11], %s1923
        // Predicated region
        $region65: #{tpu_custom_call.1} parent=47 // pred_check
          %p1925 = pneg %p196
        $region66: #{tpu_custom_call.1} parent=47 // pred_check_branch
          %1927 = sbr.rel (%p1925) target = $region68
        $region67: #{tpu_custom_call.1} parent=47 // pred_region
          %s1929 = ssub.s32 1024, 1024
          %1930 = vsyncadd %s1921, %s1929
          %s1931 = smul.addr %s26, 8
          %s1932 = smul.addr %s1931, 128
          %s1933 = scalar_lea.hbm %s7, %s1932
          %s1934 = sshll.u32 %s1924, 4
          %s1935 = int_to_ptr.vmem [resolvable:$true] %s1934
          %1940 = dma.vmem_to_hbm [thread:$0]  %s1935, 1024, %s1933, %s1921, 128, 128, 8
        $region68: #{tpu_custom_call.1} parent=47 // pred_fallthru
          _
      $region48: #{tpu_custom_call.1} parent=5 // pred_fallthru
        _
      %p1941 = scmp.le.s32.totalorder 2, %s21
      // Predicated region
      $region69: #{tpu_custom_call.1} parent=5 // pred_check
        %p1942 = pneg %p1941
      $region70: #{tpu_custom_call.1} parent=5 // pred_check_branch
        %1944 = sbr.rel (%p1942) target = $region72
      $region71: #{tpu_custom_call.1} parent=5 // pred_region
        %s1945 = ssub.s32 %s21, 2
        // Predicated region
        $region73: #{tpu_custom_call.1} parent=71 // pred_check
          %p1946 = pneg %p202
        $region74: #{tpu_custom_call.1} parent=71 // pred_check_branch
          %1948 = sbr.rel (%p1946) target = $region76
        $region75: #{tpu_custom_call.1} parent=71 // pred_region
          %s1949 = sand.u32 %s187, 1
          %s1950 = scalar_lea.sflag [#allocation5], %s1949
          %s1951 = sand.u32 %s187, 1
          %s1952 = smul.addr %s1951, 64
          %s1953 = scalar_lea.vmem [#allocation11], %s1952
          %1954 = dma.done %s1950, 1024
        $region76: #{tpu_custom_call.1} parent=71 // pred_fallthru
          _
      $region72: #{tpu_custom_call.1} parent=5 // pred_fallthru
        _
    $region6: #{tpu_custom_call.1} parent=1 // loop_footer
      %s25 = sadd.s32 1, %s21
    $region7: #{tpu_custom_call.1} parent=1 // loop_footer_branch
      %20 = sbr.rel target = $region3
    $region8: #{tpu_custom_call.1} parent=1 // loop_exit
      _
    %1955 = vsyncpa [#allocation4], 1
    %s1956 = scalar_lea.sflag [#allocation4], 1
    %1957 = vsyncpa %s1956, 1
    %1958 = vsyncpa [#allocation7], 1
    %1959 = vsyncpa [#allocation10], 1
    %1960 = vsyncpa [#allocation5], 1
    %s1961 = scalar_lea.sflag [#allocation5], 1
    %1962 = vsyncpa %s1961, 1

</llo_original>
